<compile_context>
chip_gen: v6e
topology: v6e:2x2x1
jax: 0.10.0
libtpu: 0.0.40
codegen_flags: <defaults>
</compile_context>

<pallas_src>
import jax
import jax.numpy as jnp
from jax import lax
from jax.experimental import pallas as pl
from jax.experimental.pallas import tpu as pltpu


def fire_kernel(x_ref, ws_ref, bs_ref, wf_ref, bf_ref, out_ref, pad_ref):
    # x_ref   : (1, H, W, Cin)      f32  input block (one image)
    # ws_ref  : (Cin, Cs)           bf16 squeeze 1x1 weight
    # bs_ref  : (1, Cs)             f32  squeeze bias
    # wf_ref  : (9*Cs, 2*Ce)        bf16 fused expand weight
    #                               cols [:Ce]  = expand1x1 (center tap only)
    #                               cols [Ce:]  = expand3x3 (all 9 taps)
    # bf_ref  : (1, 2*Ce)           f32  fused expand bias [b1 | b3]
    # out_ref : (1, H, W, 2*Ce)     f32  [expand1x1 | expand3x3]
    # pad_ref : (H+2, W+2, Cs)      f32  VMEM scratch (zero-padded squeeze act.)
    H = x_ref.shape[1]
    W = x_ref.shape[2]
    Cin = x_ref.shape[3]
    Cs = ws_ref.shape[1]
    Ce2 = wf_ref.shape[1]

    # --- squeeze 1x1 conv + bias + ReLU (bf16 operands, f32 accumulate) ---
    x = x_ref[0].reshape(H * W, Cin).astype(jnp.bfloat16)
    s = jnp.dot(x, ws_ref[...], preferred_element_type=jnp.float32) + bs_ref[...]
    s = jnp.maximum(s, 0.0)

    # --- padded squeeze activation: zero only the 1-px border, write interior ---
    zrow = jnp.zeros((1, W + 2, Cs), jnp.float32)
    zcol = jnp.zeros((H, 1, Cs), jnp.float32)
    pad_ref[0:1, :, :] = zrow
    pad_ref[H + 1:H + 2, :, :] = zrow
    pad_ref[1:H + 1, 0:1, :] = zcol
    pad_ref[1:H + 1, W + 1:W + 2, :] = zcol
    pad_ref[1:H + 1, 1:W + 1, :] = s.reshape(H, W, Cs)

    # --- im2col: concat the 9 shifted windows along the channel (lane) dim ---
    cols = [pad_ref[dy:dy + H, dx:dx + W, :]
            for dy in range(3) for dx in range(3)]
    a = jnp.concatenate(cols, axis=-1).reshape(H * W, 9 * Cs)
    a = a.astype(jnp.bfloat16)

    # --- single fused matmul producing [expand1x1 | expand3x3] + bias ---
    e = jnp.dot(a, wf_ref[...], preferred_element_type=jnp.float32) + bf_ref[...]

    # --- one full-block store ---
    out_ref[0] = e.reshape(H, W, Ce2).astype(out_ref.dtype)


def fire_module_pallas(x_nchw, params):
    """x_nchw: (N, Cin, H, W) float32 -> (N, 2*Ce, H, W) float32."""
    ws, bs, w1, b1, w3, b3 = (params["ws"], params["bs"], params["w1"],
                              params["b1"], params["w3"], params["b3"])
    N, Cin, H, W = x_nchw.shape
    Cs = ws.shape[1]
    Ce = w1.shape[1]

    # Fused expand weight (9*Cs, 2*Ce): im2col block k = dy*3+dx carries the
    # (dy, dx) tap; the center tap (k=4) also carries the 1x1 expand weight.
    wf = jnp.zeros((9 * Cs, 2 * Ce), jnp.float32)
    wf = wf.at[:, Ce:].set(w3.reshape(9 * Cs, Ce))      # expand3x3 -> [Ce:2Ce]
    wf = wf.at[4 * Cs:5 * Cs, :Ce].set(w1)              # expand1x1 -> [:Ce]
    bf = jnp.concatenate([b1, b3], axis=-1)             # (1, 2*Ce)

    ws_bf = ws.astype(jnp.bfloat16)
    wf_bf = wf.astype(jnp.bfloat16)

    x_nhwc = jnp.transpose(x_nchw, (0, 2, 3, 1))        # NCHW -> NHWC

    flops = 2 * N * H * W * (Cin * Cs + 9 * Cs * 2 * Ce)
    bytes_accessed = (x_nhwc.size * 4 + N * H * W * 2 * Ce * 4
                      + ws_bf.size * 2 + wf_bf.size * 2
                      + bs.size * 4 + bf.size * 4)

    out_nhwc = pl.pallas_call(
        fire_kernel,
        out_shape=jax.ShapeDtypeStruct((N, H, W, 2 * Ce), jnp.float32),
        grid_spec=pltpu.PrefetchScalarGridSpec(
            num_scalar_prefetch=0,
            grid=(N,),
            in_specs=[
                pl.BlockSpec((1, H, W, Cin), lambda n: (n, 0, 0, 0)),
                pl.BlockSpec((Cin, Cs), lambda n: (0, 0)),
                pl.BlockSpec((1, Cs), lambda n: (0, 0)),
                pl.BlockSpec((9 * Cs, 2 * Ce), lambda n: (0, 0)),
                pl.BlockSpec((1, 2 * Ce), lambda n: (0, 0)),
            ],
            out_specs=pl.BlockSpec((1, H, W, 2 * Ce), lambda n: (n, 0, 0, 0)),
            scratch_shapes=[pltpu.VMEM((H + 2, W + 2, Cs), jnp.float32)],
        ),
        compiler_params=pltpu.CompilerParams(
            dimension_semantics=("parallel",)),
        cost_estimate=pl.CostEstimate(flops=flops, transcendentals=0,
                                      bytes_accessed=bytes_accessed),
    )(x_nhwc, ws_bf, bs, wf_bf, bf)

    return jnp.transpose(out_nhwc, (0, 3, 1, 2))        # NHWC -> NCHW


def fire_module_ref(x_nchw, params):
    """Pure-JAX fp32 reference (lax.conv) mirroring the PyTorch module."""
    ws, bs, w1, b1, w3, b3 = (params["ws"], params["bs"], params["w1"],
                              params["b1"], params["w3"], params["b3"])
    x = jnp.transpose(x_nchw, (0, 2, 3, 1))  # NHWC
    dn = lax.conv_dimension_numbers(x.shape, (1, 1, ws.shape[0], ws.shape[1]),
                                    ("NHWC", "HWIO", "NHWC"))
    s = lax.conv_general_dilated(x, ws.reshape(1, 1, *ws.shape), (1, 1),
                                 "VALID", dimension_numbers=dn) + bs[0]
    s = jnp.maximum(s, 0.0)
    e1 = lax.conv_general_dilated(s, w1.reshape(1, 1, *w1.shape), (1, 1),
                                  "VALID", dimension_numbers=dn) + b1[0]
    e3 = lax.conv_general_dilated(s, w3, (1, 1), "SAME",
                                  dimension_numbers=dn) + b3[0]
    out = jnp.concatenate([e1, e3], axis=-1)
    return jnp.transpose(out, (0, 3, 1, 2))


def init_params(key, in_channels, squeeze_channels, expand_channels):
    k = jax.random.split(key, 6)
    scale = 0.1
    return {
        "ws": scale * jax.random.normal(k[0], (in_channels, squeeze_channels), jnp.float32),
        "bs": scale * jax.random.normal(k[1], (1, squeeze_channels), jnp.float32),
        "w1": scale * jax.random.normal(k[2], (squeeze_channels, expand_channels), jnp.float32),
        "b1": scale * jax.random.normal(k[3], (1, expand_channels), jnp.float32),
        "w3": scale * jax.random.normal(k[4], (3, 3, squeeze_channels, expand_channels), jnp.float32),
        "b3": scale * jax.random.normal(k[5], (1, expand_channels), jnp.float32),
    }


if __name__ == "__main__":
    key = jax.random.PRNGKey(0)
    k_x, k_p = jax.random.split(key)

    N, Cin, H, W = 2, 4, 16, 16
    squeeze_channels, expand_channels = 8, 8

    x = jax.random.normal(k_x, (N, Cin, H, W), jnp.float32)
    params = init_params(k_p, Cin, squeeze_channels, expand_channels)

    out = fire_module_pallas(x, params)
    out = jax.block_until_ready(out)

    ref = jax.block_until_ready(fire_module_ref(x, params))
    assert out.shape == (N, 2 * expand_channels, H, W)
    # bf16 matmul operands with f32 accumulation -> slightly looser tolerance
    # than the pure-fp32 reference.
    assert jnp.allclose(out, ref, atol=2e-2, rtol=2e-2)

    print("KERNEL_OK")
</pallas_src>

<mosaic_0001>
module attributes {stable_mosaic.version = 11 : i64} {
  func.func @fire_kernel(%arg0: i32, %arg1: memref<1x16x16x4xf32, #tpu.memory_space<vmem>>, %arg2: memref<4x8xbf16, #tpu.memory_space<vmem>>, %arg3: memref<1x8xf32, #tpu.memory_space<vmem>>, %arg4: memref<72x16xbf16, #tpu.memory_space<vmem>>, %arg5: memref<1x16xf32, #tpu.memory_space<vmem>>, %arg6: memref<1x16x16x16xf32, #tpu.memory_space<vmem>>, %arg7: memref<18x18x8xf32, #tpu.memory_space<vmem>>) attributes {dimension_semantics = [#tpu.dimension_semantics<parallel>], iteration_bounds = array<i64: 2>, scalar_prefetch = 0 : i64, scratch_operands = 1 : i64, tpu.core_type = #tpu.core_type<tc>, window_params = [{transform_indices = @transform_0, window_bounds = array<i64: 1, 16, 16, 4>}, {pipeline_mode = #tpu.pipeline_mode<synchronous>, transform_indices = @transform_1, window_bounds = array<i64: 4, 8>}, {pipeline_mode = #tpu.pipeline_mode<synchronous>, transform_indices = @transform_2, window_bounds = array<i64: 1, 8>}, {pipeline_mode = #tpu.pipeline_mode<synchronous>, transform_indices = @transform_3, window_bounds = array<i64: 72, 16>}, {pipeline_mode = #tpu.pipeline_mode<synchronous>, transform_indices = @transform_4, window_bounds = array<i64: 1, 16>}, {transform_indices = @transform_5, window_bounds = array<i64: 1, 16, 16, 16>}]} {
    %c0 = arith.constant 0 : index
    %c0_0 = arith.constant 0 : index
    %c0_1 = arith.constant 0 : index
    %c0_2 = arith.constant 0 : index
    %0 = vector.load %arg1[%c0, %c0_0, %c0_1, %c0_2] : memref<1x16x16x4xf32, #tpu.memory_space<vmem>>, vector<1x16x16x4xf32>
    %1 = vector.shape_cast %0 : vector<1x16x16x4xf32> to vector<16x16x4xf32>
    %2 = vector.shape_cast %1 : vector<16x16x4xf32> to vector<256x4xf32>
    %3 = arith.truncf %2 : vector<256x4xf32> to vector<256x4xbf16>
    %c0_3 = arith.constant 0 : index
    %c0_4 = arith.constant 0 : index
    %4 = vector.load %arg2[%c0_3, %c0_4] : memref<4x8xbf16, #tpu.memory_space<vmem>>, vector<4x8xbf16>
    %cst = arith.constant dense<0.000000e+00> : vector<256x8xf32>
    %5 = tpu.matmul %3, %4, %cst {dimension_numbers = #tpu.dot_dimension_numbers<[1], [0], [0], [1], [0, 0, 1, 1], [], []>} : vector<256x4xbf16>, vector<4x8xbf16>, vector<256x8xf32> -> vector<256x8xf32>
    %c0_5 = arith.constant 0 : index
    %c0_6 = arith.constant 0 : index
    %6 = vector.load %arg3[%c0_5, %c0_6] : memref<1x8xf32, #tpu.memory_space<vmem>>, vector<1x8xf32>
    %7 = vector.broadcast %6 : vector<1x8xf32> to vector<256x8xf32>
    %8 = arith.addf %5, %7 : vector<256x8xf32>
    %cst_7 = arith.constant 0.000000e+00 : f32
    %9 = vector.broadcast %cst_7 : f32 to vector<256x8xf32>
    %10 = arith.maximumf %8, %9 : vector<256x8xf32>
    %cst_8 = arith.constant 0.000000e+00 : f32
    %11 = vector.broadcast %cst_8 : f32 to vector<1x18x8xf32>
    %cst_9 = arith.constant 0.000000e+00 : f32
    %12 = vector.broadcast %cst_9 : f32 to vector<16x1x8xf32>
    %c0_10 = arith.constant 0 : index
    %c0_11 = arith.constant 0 : index
    %c0_12 = arith.constant 0 : index
    %13 = vector.load %arg7[%c0_10, %c0_11, %c0_12] : memref<18x18x8xf32, #tpu.memory_space<vmem>>, vector<1x18x8xf32>
    tpu.vector_store %arg7[%c0_10, %c0_11, %c0_12], %11 {strides = array<i32>} : memref<18x18x8xf32, #tpu.memory_space<vmem>>, vector<1x18x8xf32>,
    %c17 = arith.constant 17 : index
    %c0_13 = arith.constant 0 : index
    %c0_14 = arith.constant 0 : index
    %14 = vector.load %arg7[%c17, %c0_13, %c0_14] : memref<18x18x8xf32, #tpu.memory_space<vmem>>, vector<1x18x8xf32>
    tpu.vector_store %arg7[%c17, %c0_13, %c0_14], %11 {strides = array<i32>} : memref<18x18x8xf32, #tpu.memory_space<vmem>>, vector<1x18x8xf32>,
    %c1 = arith.constant 1 : index
    %c0_15 = arith.constant 0 : index
    %c0_16 = arith.constant 0 : index
    %15 = vector.load %arg7[%c1, %c0_15, %c0_16] : memref<18x18x8xf32, #tpu.memory_space<vmem>>, vector<16x1x8xf32>
    tpu.vector_store %arg7[%c1, %c0_15, %c0_16], %12 {strides = array<i32>} : memref<18x18x8xf32, #tpu.memory_space<vmem>>, vector<16x1x8xf32>,
    %c1_17 = arith.constant 1 : index
    %c17_18 = arith.constant 17 : index
    %c0_19 = arith.constant 0 : index
    %16 = vector.load %arg7[%c1_17, %c17_18, %c0_19] : memref<18x18x8xf32, #tpu.memory_space<vmem>>, vector<16x1x8xf32>
    tpu.vector_store %arg7[%c1_17, %c17_18, %c0_19], %12 {strides = array<i32>} : memref<18x18x8xf32, #tpu.memory_space<vmem>>, vector<16x1x8xf32>,
    %17 = vector.shape_cast %10 : vector<256x8xf32> to vector<16x16x8xf32>
    %c1_20 = arith.constant 1 : index
    %c1_21 = arith.constant 1 : index
    %c0_22 = arith.constant 0 : index
    %18 = vector.load %arg7[%c1_20, %c1_21, %c0_22] : memref<18x18x8xf32, #tpu.memory_space<vmem>>, vector<16x16x8xf32>
    tpu.vector_store %arg7[%c1_20, %c1_21, %c0_22], %17 {strides = array<i32>} : memref<18x18x8xf32, #tpu.memory_space<vmem>>, vector<16x16x8xf32>,
    %c0_23 = arith.constant 0 : index
    %c0_24 = arith.constant 0 : index
    %c0_25 = arith.constant 0 : index
    %19 = vector.load %arg7[%c0_23, %c0_24, %c0_25] : memref<18x18x8xf32, #tpu.memory_space<vmem>>, vector<16x16x8xf32>
    %c0_26 = arith.constant 0 : index
    %c1_27 = arith.constant 1 : index
    %c0_28 = arith.constant 0 : index
    %20 = vector.load %arg7[%c0_26, %c1_27, %c0_28] : memref<18x18x8xf32, #tpu.memory_space<vmem>>, vector<16x16x8xf32>
    %c0_29 = arith.constant 0 : index
    %c2 = arith.constant 2 : index
    %c0_30 = arith.constant 0 : index
    %21 = vector.load %arg7[%c0_29, %c2, %c0_30] : memref<18x18x8xf32, #tpu.memory_space<vmem>>, vector<16x16x8xf32>
    %c1_31 = arith.constant 1 : index
    %c0_32 = arith.constant 0 : index
    %c0_33 = arith.constant 0 : index
    %22 = vector.load %arg7[%c1_31, %c0_32, %c0_33] : memref<18x18x8xf32, #tpu.memory_space<vmem>>, vector<16x16x8xf32>
    %c1_34 = arith.constant 1 : index
    %c1_35 = arith.constant 1 : index
    %c0_36 = arith.constant 0 : index
    %23 = vector.load %arg7[%c1_34, %c1_35, %c0_36] : memref<18x18x8xf32, #tpu.memory_space<vmem>>, vector<16x16x8xf32>
    %c1_37 = arith.constant 1 : index
    %c2_38 = arith.constant 2 : index
    %c0_39 = arith.constant 0 : index
    %24 = vector.load %arg7[%c1_37, %c2_38, %c0_39] : memref<18x18x8xf32, #tpu.memory_space<vmem>>, vector<16x16x8xf32>
    %c2_40 = arith.constant 2 : index
    %c0_41 = arith.constant 0 : index
    %c0_42 = arith.constant 0 : index
    %25 = vector.load %arg7[%c2_40, %c0_41, %c0_42] : memref<18x18x8xf32, #tpu.memory_space<vmem>>, vector<16x16x8xf32>
    %c2_43 = arith.constant 2 : index
    %c1_44 = arith.constant 1 : index
    %c0_45 = arith.constant 0 : index
    %26 = vector.load %arg7[%c2_43, %c1_44, %c0_45] : memref<18x18x8xf32, #tpu.memory_space<vmem>>, vector<16x16x8xf32>
    %c2_46 = arith.constant 2 : index
    %c2_47 = arith.constant 2 : index
    %c0_48 = arith.constant 0 : index
    %27 = vector.load %arg7[%c2_46, %c2_47, %c0_48] : memref<18x18x8xf32, #tpu.memory_space<vmem>>, vector<16x16x8xf32>
    %28 = tpu.concatenate %19, %20, %21, %22, %23, %24, %25, %26, %27 in 2 : vector<16x16x8xf32>, vector<16x16x8xf32>, vector<16x16x8xf32>, vector<16x16x8xf32>, vector<16x16x8xf32>, vector<16x16x8xf32>, vector<16x16x8xf32>, vector<16x16x8xf32>, vector<16x16x8xf32> -> vector<16x16x72xf32>
    %29 = vector.shape_cast %28 : vector<16x16x72xf32> to vector<256x72xf32>
    %30 = arith.truncf %29 : vector<256x72xf32> to vector<256x72xbf16>
    %c0_49 = arith.constant 0 : index
    %c0_50 = arith.constant 0 : index
    %31 = vector.load %arg4[%c0_49, %c0_50] : memref<72x16xbf16, #tpu.memory_space<vmem>>, vector<72x16xbf16>
    %cst_51 = arith.constant dense<0.000000e+00> : vector<256x16xf32>
    %32 = tpu.matmul %30, %31, %cst_51 {dimension_numbers = #tpu.dot_dimension_numbers<[1], [0], [0], [1], [0, 0, 1, 1], [], []>} : vector<256x72xbf16>, vector<72x16xbf16>, vector<256x16xf32> -> vector<256x16xf32>
    %c0_52 = arith.constant 0 : index
    %c0_53 = arith.constant 0 : index
    %33 = vector.load %arg5[%c0_52, %c0_53] : memref<1x16xf32, #tpu.memory_space<vmem>>, vector<1x16xf32>
    %34 = vector.broadcast %33 : vector<1x16xf32> to vector<256x16xf32>
    %35 = arith.addf %32, %34 : vector<256x16xf32>
    %36 = vector.shape_cast %35 : vector<256x16xf32> to vector<16x16x16xf32>
    %c0_54 = arith.constant 0 : index
    %c0_55 = arith.constant 0 : index
    %c0_56 = arith.constant 0 : index
    %c0_57 = arith.constant 0 : index
    %37 = vector.load %arg6[%c0_54, %c0_55, %c0_56, %c0_57] : memref<1x16x16x16xf32, #tpu.memory_space<vmem>>, vector<1x16x16x16xf32>
    %38 = vector.shape_cast %37 : vector<1x16x16x16xf32> to vector<16x16x16xf32>
    %39 = vector.shape_cast %36 : vector<16x16x16xf32> to vector<1x16x16x16xf32>
    tpu.vector_store %arg6[%c0_54, %c0_55, %c0_56, %c0_57], %39 {strides = array<i32>} : memref<1x16x16x16xf32, #tpu.memory_space<vmem>>, vector<1x16x16x16xf32>,
    return
  }
  func.func @transform_0(%arg0: i32) -> (i32, i32, i32, i32) {
    %c0_i32 = arith.constant 0 : i32
    %c0_i32_0 = arith.constant 0 : i32
    %c0_i32_1 = arith.constant 0 : i32
    %c0_i32_2 = arith.constant 0 : i32
    return %arg0, %c0_i32, %c0_i32_0, %c0_i32_1 : i32, i32, i32, i32
  }
  func.func @transform_1(%arg0: i32) -> (i32, i32) {
    %c0_i32 = arith.constant 0 : i32
    %c0_i32_0 = arith.constant 0 : i32
    %c0_i32_1 = arith.constant 0 : i32
    return %c0_i32, %c0_i32_0 : i32, i32
  }
  func.func @transform_2(%arg0: i32) -> (i32, i32) {
    %c0_i32 = arith.constant 0 : i32
    %c0_i32_0 = arith.constant 0 : i32
    %c0_i32_1 = arith.constant 0 : i32
    return %c0_i32, %c0_i32_0 : i32, i32
  }
  func.func @transform_3(%arg0: i32) -> (i32, i32) {
    %c0_i32 = arith.constant 0 : i32
    %c0_i32_0 = arith.constant 0 : i32
    %c0_i32_1 = arith.constant 0 : i32
    return %c0_i32, %c0_i32_0 : i32, i32
  }
  func.func @transform_4(%arg0: i32) -> (i32, i32) {
    %c0_i32 = arith.constant 0 : i32
    %c0_i32_0 = arith.constant 0 : i32
    %c0_i32_1 = arith.constant 0 : i32
    return %c0_i32, %c0_i32_0 : i32, i32
  }
  func.func @transform_5(%arg0: i32) -> (i32, i32, i32, i32) {
    %c0_i32 = arith.constant 0 : i32
    %c0_i32_0 = arith.constant 0 : i32
    %c0_i32_1 = arith.constant 0 : i32
    %c0_i32_2 = arith.constant 0 : i32
    return %arg0, %c0_i32, %c0_i32_0, %c0_i32_1 : i32, i32, i32, i32
  }
}

</mosaic_0001>

<llo_original>
// kernel: tpu_custom_call.1
$region0: #{tpu_custom_call.1}
  #allocation0 [shape = 'u32[]', space=smem, size = 0x4, offset = 0x4, fixed_abs, tag = 'smem constant byte address 0x4 - core index']
  #allocation1 [shape = 'u32[144,128]{1,0:T(1,128)}', space=vmem, size = 0x12000, scoped, tag = 'internal scratch']
  #allocation2 [shape = 'f32[18,18,8]{2,1,0:T(8,128)}', space=vmem, size = 0x36000, scoped, tag = 'scratch operand']
  %s0 = inlined_call_operand.vmem [shape: f32[2,16,16,4], index: 0, kind: input, shape index: {}]
  %s1 = inlined_call_operand.vmem [shape: bf16[4,8], index: 1, kind: input, shape index: {}]
  %s2 = inlined_call_operand.vmem [shape: f32[1,8], index: 2, kind: input, shape index: {}]
  %s3 = inlined_call_operand.vmem [shape: bf16[72,16], index: 3, kind: input, shape index: {}]
  %s4 = inlined_call_operand.vmem [shape: f32[1,16], index: 4, kind: input, shape index: {}]
  %s5 = inlined_call_operand.hbm [shape: f32[2,16,16,16], index: 5, kind: output, shape index: {}]
  %s6 = sld [smem:[#allocation0]]
  $region53: #{tpu_custom_call.1} parent=0
    _
  %s8 = ssub.s32 1, %s6
  %s9 = scalar_select 0, %s8, %s6
  $region1: #{tpu_custom_call.1} parent=0
    #allocation3 [shape = 'u8[262144]{0}', space=vmem, size = 0x40000, scoped, tag = 'output window, operand 0']
    #allocation4 [shape = 's32[2]{0}', space=sflag, size = 0x8, scoped, tag = 'scoped memory for tpu_custom_call.1']
    %10 = vsyncpa [#allocation4], 0
    %s11 = scalar_lea.sflag [#allocation4], 1
    %12 = vsyncpa %s11, 0
    loop: start=0, step=1, limit=4
    $region2: #{tpu_custom_call.1} parent=1 // loop_pre_header
      _
    $region3: #{tpu_custom_call.1} parent=1 // loop_header
      %s14 = sphi 0, %s18
      %p15 = scmp.ge.s32.totalorder %s14, 4
      %s24 = sphi 0, %s26
      %s27 = sphi 0, %s24
      %s28 = sphi 0, %s27
      %s44 = sphi 0, %s28
      %s48 = sphi 0, %s48
      %s50 = sphi 0, %s48
      %s51 = sphi 0, %s50
      %s65 = sphi 0, %s51
      %s69 = sphi 0, %s69
      %s71 = sphi 0, %s69
      %s72 = sphi 0, %s71
      %s86 = sphi 0, %s72
      %s90 = sphi 0, %s90
      %s92 = sphi 0, %s90
      %s93 = sphi 0, %s92
      %s107 = sphi 0, %s93
      %s111 = sphi 0, %s111
      %s113 = sphi 0, %s111
      %s114 = sphi 0, %s113
      %s128 = sphi 0, %s114
      %s134 = sphi 0, %s136
      %s137 = sphi 0, %s134
      %s138 = sphi 0, %s137
      %s154 = sphi 0, %s138
    $region4: #{tpu_custom_call.1} parent=1 // loop_header_branch
      %17 = sbr.rel (%p15) target = $region8
    $region5: #{tpu_custom_call.1} parent=1 // loop_body
      %s19 = ssub.s32 %s14, 1
      %s20 = ssub.s32 %s14, 2
      %s21 = sadd.s32 %s14, 1
      %s22 = ssub.s32 %s14, %s21
      %p23 = scmp.eq.s32.totalorder %s22, 0
      %s25 = sadd.s32 %s24, 1
      %s26 = scalar_select %p23, %s24, %s25
      %p29 = pneg %p23
      %p30 = scmp.eq.s32.totalorder %s14, 1
      %p31 = por %p29, %p30
      %p32 = scmp.ne.s32.totalorder %s24, %s27
      %p33 = scmp.eq.s32.totalorder %s14, 0
      %p34 = por %p32, %p33
      %p35 = scmp.ne.s32.totalorder %s24, %s27
      %p36 = scmp.eq.s32.totalorder %s19, 1
      %p37 = por %p35, %p36
      %p38 = scmp.ne.s32.totalorder %s27, %s28
      %p39 = scmp.eq.s32.totalorder %s19, 0
      %p40 = por %p38, %p39
      %p41 = scmp.ne.s32.totalorder %s27, %s28
      %p42 = scmp.eq.s32.totalorder %s20, 1
      %p43 = por %p41, %p42
      %p45 = scmp.ne.s32.totalorder %s28, %s44
      %p46 = scmp.eq.s32.totalorder %s20, 0
      %p47 = por %p45, %p46
      %s49 = sadd.s32 %s48, 1
      %p52 = scmp.eq.s32.totalorder %s14, 1
      %p53 = scmp.ne.s32.totalorder %s48, %s50
      %p54 = scmp.eq.s32.totalorder %s14, 0
      %p55 = por %p53, %p54
      %p56 = scmp.ne.s32.totalorder %s48, %s50
      %p57 = scmp.eq.s32.totalorder %s19, 1
      %p58 = por %p56, %p57
      %p59 = scmp.ne.s32.totalorder %s50, %s51
      %p60 = scmp.eq.s32.totalorder %s19, 0
      %p61 = por %p59, %p60
      %p62 = scmp.ne.s32.totalorder %s50, %s51
      %p63 = scmp.eq.s32.totalorder %s20, 1
      %p64 = por %p62, %p63
      %p66 = scmp.ne.s32.totalorder %s51, %s65
      %p67 = scmp.eq.s32.totalorder %s20, 0
      %p68 = por %p66, %p67
      %s70 = sadd.s32 %s69, 1
      %p73 = scmp.eq.s32.totalorder %s14, 1
      %p74 = scmp.ne.s32.totalorder %s69, %s71
      %p75 = scmp.eq.s32.totalorder %s14, 0
      %p76 = por %p74, %p75
      %p77 = scmp.ne.s32.totalorder %s69, %s71
      %p78 = scmp.eq.s32.totalorder %s19, 1
      %p79 = por %p77, %p78
      %p80 = scmp.ne.s32.totalorder %s71, %s72
      %p81 = scmp.eq.s32.totalorder %s19, 0
      %p82 = por %p80, %p81
      %p83 = scmp.ne.s32.totalorder %s71, %s72
      %p84 = scmp.eq.s32.totalorder %s20, 1
      %p85 = por %p83, %p84
      %p87 = scmp.ne.s32.totalorder %s72, %s86
      %p88 = scmp.eq.s32.totalorder %s20, 0
      %p89 = por %p87, %p88
      %s91 = sadd.s32 %s90, 1
      %p94 = scmp.eq.s32.totalorder %s14, 1
      %p95 = scmp.ne.s32.totalorder %s90, %s92
      %p96 = scmp.eq.s32.totalorder %s14, 0
      %p97 = por %p95, %p96
      %p98 = scmp.ne.s32.totalorder %s90, %s92
      %p99 = scmp.eq.s32.totalorder %s19, 1
      %p100 = por %p98, %p99
      %p101 = scmp.ne.s32.totalorder %s92, %s93
      %p102 = scmp.eq.s32.totalorder %s19, 0
      %p103 = por %p101, %p102
      %p104 = scmp.ne.s32.totalorder %s92, %s93
      %p105 = scmp.eq.s32.totalorder %s20, 1
      %p106 = por %p104, %p105
      %p108 = scmp.ne.s32.totalorder %s93, %s107
      %p109 = scmp.eq.s32.totalorder %s20, 0
      %p110 = por %p108, %p109
      %s112 = sadd.s32 %s111, 1
      %p115 = scmp.eq.s32.totalorder %s14, 1
      %p116 = scmp.ne.s32.totalorder %s111, %s113
      %p117 = scmp.eq.s32.totalorder %s14, 0
      %p118 = por %p116, %p117
      %p119 = scmp.ne.s32.totalorder %s111, %s113
      %p120 = scmp.eq.s32.totalorder %s19, 1
      %p121 = por %p119, %p120
      %p122 = scmp.ne.s32.totalorder %s113, %s114
      %p123 = scmp.eq.s32.totalorder %s19, 0
      %p124 = por %p122, %p123
      %p125 = scmp.ne.s32.totalorder %s113, %s114
      %p126 = scmp.eq.s32.totalorder %s20, 1
      %p127 = por %p125, %p126
      %p129 = scmp.ne.s32.totalorder %s114, %s128
      %p130 = scmp.eq.s32.totalorder %s20, 0
      %p131 = por %p129, %p130
      %s132 = ssub.s32 %s14, %s21
      %p133 = scmp.eq.s32.totalorder %s132, 0
      %s135 = sadd.s32 %s134, 1
      %s136 = scalar_select %p133, %s134, %s135
      %p139 = pneg %p133
      %p140 = scmp.eq.s32.totalorder %s14, 1
      %p141 = por %p139, %p140
      %p142 = scmp.ne.s32.totalorder %s134, %s137
      %p143 = scmp.eq.s32.totalorder %s14, 0
      %p144 = por %p142, %p143
      %p145 = scmp.ne.s32.totalorder %s134, %s137
      %p146 = scmp.eq.s32.totalorder %s19, 1
      %p147 = por %p145, %p146
      %p148 = scmp.ne.s32.totalorder %s137, %s138
      %p149 = scmp.eq.s32.totalorder %s19, 0
      %p150 = por %p148, %p149
      %p151 = scmp.ne.s32.totalorder %s137, %s138
      %p152 = scmp.eq.s32.totalorder %s20, 1
      %p153 = por %p151, %p152
      %p155 = scmp.ne.s32.totalorder %s138, %s154
      %p156 = scmp.eq.s32.totalorder %s20, 0
      %p157 = por %p155, %p156
      %p158 = scmp.le.s32.totalorder 1, %s14
      %p159 = scmp.lt.s32.totalorder %s14, 3
      %p160 = pnand %p158, %p159
      %p161 = pneg %p160
      // Predicated region
      $region9: #{tpu_custom_call.1} parent=5 // pred_check
        _
      $region10: #{tpu_custom_call.1} parent=5 // pred_check_branch
        %163 = sbr.rel (%p160) target = $region12
      $region11: #{tpu_custom_call.1} parent=5 // pred_region
        %s164 = ssub.s32 %s14, 1
        // Predicated region
        $region13: #{tpu_custom_call.1} parent=11 // pred_check
          %p165 = pneg %p61
        $region14: #{tpu_custom_call.1} parent=11 // pred_check_branch
          %167 = sbr.rel (%p165) target = $region16
        $region15: #{tpu_custom_call.1} parent=11 // pred_region
          _
        $region16: #{tpu_custom_call.1} parent=11 // pred_fallthru
          _
        // Predicated region
        $region17: #{tpu_custom_call.1} parent=11 // pred_check
          %p168 = pneg %p82
        $region18: #{tpu_custom_call.1} parent=11 // pred_check_branch
          %170 = sbr.rel (%p168) target = $region20
        $region19: #{tpu_custom_call.1} parent=11 // pred_region
          _
        $region20: #{tpu_custom_call.1} parent=11 // pred_fallthru
          _
        // Predicated region
        $region21: #{tpu_custom_call.1} parent=11 // pred_check
          %p171 = pneg %p103
        $region22: #{tpu_custom_call.1} parent=11 // pred_check_branch
          %173 = sbr.rel (%p171) target = $region24
        $region23: #{tpu_custom_call.1} parent=11 // pred_region
          _
        $region24: #{tpu_custom_call.1} parent=11 // pred_fallthru
          _
        // Predicated region
        $region25: #{tpu_custom_call.1} parent=11 // pred_check
          %p174 = pneg %p124
        $region26: #{tpu_custom_call.1} parent=11 // pred_check_branch
          %176 = sbr.rel (%p174) target = $region28
        $region27: #{tpu_custom_call.1} parent=11 // pred_region
          _
        $region28: #{tpu_custom_call.1} parent=11 // pred_fallthru
          _
      $region12: #{tpu_custom_call.1} parent=5 // pred_fallthru
        _
      %p177 = scmp.lt.s32.totalorder %s14, 2
      // Predicated region
      $region29: #{tpu_custom_call.1} parent=5 // pred_check
        %p178 = pneg %p177
      $region30: #{tpu_custom_call.1} parent=5 // pred_check_branch
        %180 = sbr.rel (%p178) target = $region32
      $region31: #{tpu_custom_call.1} parent=5 // pred_region
        // Predicated region
        $region33: #{tpu_custom_call.1} parent=31 // pred_check
          %p181 = pneg %p34
        $region34: #{tpu_custom_call.1} parent=31 // pred_check_branch
          %183 = sbr.rel (%p181) target = $region36
        $region35: #{tpu_custom_call.1} parent=31 // pred_region
          %p184 = scmp.lt.s32.totalorder %s14, 1
          %s185 = scalar_select %p184, %s14, 1
          %s186 = smul.addr %s185, 32
          %s187 = smul.addr %s186, 8
          %s188 = scalar_lea.vmem %s0, %s187
        $region36: #{tpu_custom_call.1} parent=31 // pred_fallthru
          _
      $region32: #{tpu_custom_call.1} parent=5 // pred_fallthru
        _
      %p189 = scmp.le.s32.totalorder 1, %s14
      %p190 = scmp.lt.s32.totalorder %s14, 3
      %p191 = pnand %p189, %p190
      %p192 = pneg %p191
      // Predicated region
      $region37: #{tpu_custom_call.1} parent=5 // pred_check
        _
      $region38: #{tpu_custom_call.1} parent=5 // pred_check_branch
        %194 = sbr.rel (%p191) target = $region40
      $region39: #{tpu_custom_call.1} parent=5 // pred_region
        %s195 = ssub.s32 %s14, 1
        %p196 = scmp.lt.s32.totalorder %s19, 1
        %s197 = scalar_select %p196, %s19, 1
        %s198 = smul.addr %s197, 32
        %s199 = smul.addr %s198, 8
        %s200 = scalar_lea.vmem %s0, %s199
        %p201 = pneg %p40
        %p202 = pneg %p37
        %p203 = pneg %p61
        %p204 = pneg %p58
        %p205 = pneg %p82
        %p206 = pneg %p79
        %p207 = pneg %p103
        %p208 = pneg %p100
        %p209 = pneg %p124
        %p210 = pneg %p121
        %p211 = pneg %p150
        %p212 = pneg %p147
        %s213 = sand.u32 %s137, 1
        %s214 = scalar_lea.sflag [#allocation4], %s213
        %s215 = sand.u32 %s137, 1
        %s216 = smul.addr %s215, 256
        %s217 = scalar_lea.vmem [#allocation3], %s216
        %p218 = scmp.lt.s32.totalorder %s19, 1
        %s219 = scalar_select %p218, %s19, 1
        %s220 = smul.addr %s219, 32
        %s221 = smul.addr %s220, 8
        %s222 = scalar_lea.vmem %s0, %s221
        %v224 = vld [vmem:[%s222] sm:$0xff]
        %v225 = vld [vmem:[%s222 + $0x8] sm:$0xff]
        %v226 = vld [vmem:[%s222 + $0x10] sm:$0xff]
        %v227 = vld [vmem:[%s222 + $0x18] sm:$0xff]
        %v228 = vld [vmem:[%s222 + $0x20] sm:$0xff]
        %v229 = vld [vmem:[%s222 + $0x28] sm:$0xff]
        %v230 = vld [vmem:[%s222 + $0x30] sm:$0xff]
        %v231 = vld [vmem:[%s222 + $0x38] sm:$0xff]
        %v232 = vld [vmem:[%s222 + $0x40] sm:$0xff]
        %v233 = vld [vmem:[%s222 + $0x48] sm:$0xff]
        %v234 = vld [vmem:[%s222 + $0x50] sm:$0xff]
        %v235 = vld [vmem:[%s222 + $0x58] sm:$0xff]
        %v236 = vld [vmem:[%s222 + $0x60] sm:$0xff]
        %v237 = vld [vmem:[%s222 + $0x68] sm:$0xff]
        %v238 = vld [vmem:[%s222 + $0x70] sm:$0xff]
        %v239 = vld [vmem:[%s222 + $0x78] sm:$0xff]
        %v240 = vld [vmem:[%s222 + $0x80] sm:$0xff]
        %v241 = vld [vmem:[%s222 + $0x88] sm:$0xff]
        %v242 = vld [vmem:[%s222 + $0x90] sm:$0xff]
        %v243 = vld [vmem:[%s222 + $0x98] sm:$0xff]
        %v244 = vld [vmem:[%s222 + $0xa0] sm:$0xff]
        %v245 = vld [vmem:[%s222 + $0xa8] sm:$0xff]
        %v246 = vld [vmem:[%s222 + $0xb0] sm:$0xff]
        %v247 = vld [vmem:[%s222 + $0xb8] sm:$0xff]
        %v248 = vld [vmem:[%s222 + $0xc0] sm:$0xff]
        %v249 = vld [vmem:[%s222 + $0xc8] sm:$0xff]
        %v250 = vld [vmem:[%s222 + $0xd0] sm:$0xff]
        %v251 = vld [vmem:[%s222 + $0xd8] sm:$0xff]
        %v252 = vld [vmem:[%s222 + $0xe0] sm:$0xff]
        %v253 = vld [vmem:[%s222 + $0xe8] sm:$0xff]
        %v254 = vld [vmem:[%s222 + $0xf0] sm:$0xff]
        %v255 = vld [vmem:[%s222 + $0xf8] sm:$0xff]
        %v256 = vpack.c.bf16 %v225, %v224
        %v257 = vpack.c.bf16 %v227, %v226
        %v258 = vpack.c.bf16 %v229, %v228
        %v259 = vpack.c.bf16 %v231, %v230
        %v260 = vpack.c.bf16 %v233, %v232
        %v261 = vpack.c.bf16 %v235, %v234
        %v262 = vpack.c.bf16 %v237, %v236
        %v263 = vpack.c.bf16 %v239, %v238
        %v264 = vpack.c.bf16 %v241, %v240
        %v265 = vpack.c.bf16 %v243, %v242
        %v266 = vpack.c.bf16 %v245, %v244
        %v267 = vpack.c.bf16 %v247, %v246
        %v268 = vpack.c.bf16 %v249, %v248
        %v269 = vpack.c.bf16 %v251, %v250
        %v270 = vpack.c.bf16 %v253, %v252
        %v271 = vpack.c.bf16 %v255, %v254
        %v272 = vld [vmem:[%s1] sm:$0x3]
        %v273 = vld [vmem:[%s2] sm:$0x1]
        %v275 = vlaneseq
        %v276 = vshrl.u32 %v275, 7
        %v277 = vsub.s32 0, %v276
        %v278 = vrot.slane %v273, %v277
        %vm280 = vcmask 31744
        %v282 = vsel %vm280, %v256, 0
        %v285 = vsel %vm280, %v257, 0
        %v288 = vsel %vm280, %v258, 0
        %v291 = vsel %vm280, %v259, 0
        %v294 = vsel %vm280, %v260, 0
        %v297 = vsel %vm280, %v261, 0
        %v300 = vsel %vm280, %v262, 0
        %v303 = vsel %vm280, %v263, 0
        %v306 = vsel %vm280, %v264, 0
        %v309 = vsel %vm280, %v265, 0
        %v312 = vsel %vm280, %v266, 0
        %v315 = vsel %vm280, %v267, 0
        %v318 = vsel %vm280, %v268, 0
        %v321 = vsel %vm280, %v269, 0
        %v324 = vsel %vm280, %v270, 0
        %v327 = vsel %vm280, %v271, 0
        %vm329 = vcmask 1041408
        %v331 = vsel %vm329, %v272, 0
        %333 = vmatprep.subr.bf16.mxu0 0
        %334 = vmatpush1.bf16.msra.mxu0 0
        %335 = vmatprep.subr.bf16.mxu0 0
        %336 = vmatpush1.bf16.msra.mxu0 0
        %337 = vmatprep.subr.bf16.mxu0 0
        %338 = vmatpush1.bf16.msra.mxu0 0
        %339 = vmatprep.subr.bf16.mxu0 0
        %340 = vmatpush1.bf16.msra.mxu0 0
        %341 = vmatprep.subr.bf16.mxu0 0
        %342 = vmatpush1.bf16.msra.mxu0 0
        %343 = vmatprep.subr.bf16.mxu0 0
        %344 = vmatpush1.bf16.msra.mxu0 0
        %345 = vmatprep.subr.bf16.mxu0 0
        %346 = vmatpush1.bf16.msra.mxu0 0
        %347 = vmatprep.subr.bf16.mxu0 0
        %348 = vmatpush1.bf16.msra.mxu0 %v331
        %349 = vmatprep.subr.bf16.mxu0 0
        %350 = vmatpush2.bf16.msra.mxu0 0
        %351 = vmatprep.subr.bf16.mxu0 0
        %352 = vmatpush2.bf16.msra.mxu0 0
        %353 = vmatprep.subr.bf16.mxu0 0
        %354 = vmatpush2.bf16.msra.mxu0 0
        %355 = vmatprep.subr.bf16.mxu0 0
        %356 = vmatpush2.bf16.msra.mxu0 0
        %357 = vmatprep.subr.bf16.mxu0 0
        %358 = vmatpush2.bf16.msra.mxu0 0
        %359 = vmatprep.subr.bf16.mxu0 0
        %360 = vmatpush2.bf16.msra.mxu0 0
        %361 = vmatprep.subr.bf16.mxu0 0
        %362 = vmatpush2.bf16.msra.mxu0 0
        %363 = vmatprep.subr.bf16.mxu0 0
        %364 = vmatpush2.bf16.msra.mxu0 0
        %365 = vmatprep.mubr.bf16.mxu0 0
        %366 = vmatmul.mubr.bf16.gmra.mxu0 %v282
        %v367 = vpop.f32.mrf.mxu0
        %v368 = vadd.f32 %v278, %v367
        %v369 = vpop.f32.mrf.mxu0
        %v370 = vpop.f32.mrf.mxu0
        %v371 = vadd.f32 %v278, %v370
        %v372 = vpop.f32.mrf.mxu0
        %373 = vmatprep.mubr.bf16.mxu0 0
        %374 = vmatmul.mubr.bf16.gmra.mxu0 %v285
        %v375 = vpop.f32.mrf.mxu0
        %v376 = vadd.f32 %v278, %v375
        %v377 = vpop.f32.mrf.mxu0
        %v378 = vpop.f32.mrf.mxu0
        %v379 = vadd.f32 %v278, %v378
        %v380 = vpop.f32.mrf.mxu0
        %381 = vmatprep.mubr.bf16.mxu0 0
        %382 = vmatmul.mubr.bf16.gmra.mxu0 %v288
        %v383 = vpop.f32.mrf.mxu0
        %v384 = vadd.f32 %v278, %v383
        %v385 = vpop.f32.mrf.mxu0
        %v386 = vpop.f32.mrf.mxu0
        %v387 = vadd.f32 %v278, %v386
        %v388 = vpop.f32.mrf.mxu0
        %389 = vmatprep.mubr.bf16.mxu0 0
        %390 = vmatmul.mubr.bf16.gmra.mxu0 %v291
        %v391 = vpop.f32.mrf.mxu0
        %v392 = vadd.f32 %v278, %v391
        %v393 = vpop.f32.mrf.mxu0
        %v394 = vpop.f32.mrf.mxu0
        %v395 = vadd.f32 %v278, %v394
        %v396 = vpop.f32.mrf.mxu0
        %397 = vmatprep.mubr.bf16.mxu0 0
        %398 = vmatmul.mubr.bf16.gmra.mxu0 %v294
        %v399 = vpop.f32.mrf.mxu0
        %v400 = vadd.f32 %v278, %v399
        %v401 = vpop.f32.mrf.mxu0
        %v402 = vpop.f32.mrf.mxu0
        %v403 = vadd.f32 %v278, %v402
        %v404 = vpop.f32.mrf.mxu0
        %405 = vmatprep.mubr.bf16.mxu0 0
        %406 = vmatmul.mubr.bf16.gmra.mxu0 %v297
        %v407 = vpop.f32.mrf.mxu0
        %v408 = vadd.f32 %v278, %v407
        %v409 = vpop.f32.mrf.mxu0
        %v410 = vpop.f32.mrf.mxu0
        %v411 = vadd.f32 %v278, %v410
        %v412 = vpop.f32.mrf.mxu0
        %413 = vmatprep.mubr.bf16.mxu0 0
        %414 = vmatmul.mubr.bf16.gmra.mxu0 %v300
        %v415 = vpop.f32.mrf.mxu0
        %v416 = vadd.f32 %v278, %v415
        %v417 = vpop.f32.mrf.mxu0
        %v418 = vpop.f32.mrf.mxu0
        %v419 = vadd.f32 %v278, %v418
        %v420 = vpop.f32.mrf.mxu0
        %421 = vmatprep.mubr.bf16.mxu0 0
        %422 = vmatmul.mubr.bf16.gmra.mxu0 %v303
        %v423 = vpop.f32.mrf.mxu0
        %v424 = vadd.f32 %v278, %v423
        %v425 = vpop.f32.mrf.mxu0
        %v426 = vpop.f32.mrf.mxu0
        %v427 = vadd.f32 %v278, %v426
        %v428 = vpop.f32.mrf.mxu0
        %429 = vmatprep.mubr.bf16.mxu0 0
        %430 = vmatmul.mubr.bf16.gmra.mxu0 %v306
        %v431 = vpop.f32.mrf.mxu0
        %v432 = vadd.f32 %v278, %v431
        %v433 = vpop.f32.mrf.mxu0
        %v434 = vpop.f32.mrf.mxu0
        %v435 = vadd.f32 %v278, %v434
        %v436 = vpop.f32.mrf.mxu0
        %437 = vmatprep.mubr.bf16.mxu0 0
        %438 = vmatmul.mubr.bf16.gmra.mxu0 %v309
        %v439 = vpop.f32.mrf.mxu0
        %v440 = vadd.f32 %v278, %v439
        %v441 = vpop.f32.mrf.mxu0
        %v442 = vpop.f32.mrf.mxu0
        %v443 = vadd.f32 %v278, %v442
        %v444 = vpop.f32.mrf.mxu0
        %445 = vmatprep.mubr.bf16.mxu0 0
        %446 = vmatmul.mubr.bf16.gmra.mxu0 %v312
        %v447 = vpop.f32.mrf.mxu0
        %v448 = vadd.f32 %v278, %v447
        %v449 = vpop.f32.mrf.mxu0
        %v450 = vpop.f32.mrf.mxu0
        %v451 = vadd.f32 %v278, %v450
        %v452 = vpop.f32.mrf.mxu0
        %453 = vmatprep.mubr.bf16.mxu0 0
        %454 = vmatmul.mubr.bf16.gmra.mxu0 %v315
        %v455 = vpop.f32.mrf.mxu0
        %v456 = vadd.f32 %v278, %v455
        %v457 = vpop.f32.mrf.mxu0
        %v458 = vpop.f32.mrf.mxu0
        %v459 = vadd.f32 %v278, %v458
        %v460 = vpop.f32.mrf.mxu0
        %461 = vmatprep.mubr.bf16.mxu0 0
        %462 = vmatmul.mubr.bf16.gmra.mxu0 %v318
        %v463 = vpop.f32.mrf.mxu0
        %v464 = vadd.f32 %v278, %v463
        %v465 = vpop.f32.mrf.mxu0
        %v466 = vpop.f32.mrf.mxu0
        %v467 = vadd.f32 %v278, %v466
        %v468 = vpop.f32.mrf.mxu0
        %469 = vmatprep.mubr.bf16.mxu0 0
        %470 = vmatmul.mubr.bf16.gmra.mxu0 %v321
        %v471 = vpop.f32.mrf.mxu0
        %v472 = vadd.f32 %v278, %v471
        %v473 = vpop.f32.mrf.mxu0
        %v474 = vpop.f32.mrf.mxu0
        %v475 = vadd.f32 %v278, %v474
        %v476 = vpop.f32.mrf.mxu0
        %477 = vmatprep.mubr.bf16.mxu0 0
        %478 = vmatmul.mubr.bf16.gmra.mxu0 %v324
        %v479 = vpop.f32.mrf.mxu0
        %v480 = vadd.f32 %v278, %v479
        %v481 = vpop.f32.mrf.mxu0
        %v482 = vpop.f32.mrf.mxu0
        %v483 = vadd.f32 %v278, %v482
        %v484 = vpop.f32.mrf.mxu0
        %485 = vmatprep.mubr.bf16.mxu0 0
        %486 = vmatmul.mubr.bf16.gmra.mxu0 %v327
        %v487 = vpop.f32.mrf.mxu0
        %v488 = vadd.f32 %v278, %v487
        %v489 = vpop.f32.mrf.mxu0
        %v490 = vpop.f32.mrf.mxu0
        %v491 = vadd.f32 %v278, %v490
        %v492 = vpop.f32.mrf.mxu0
        %493 = vdwg.mxu0
        %v494 = vmax.f32 %v368, 0.0
        %v495 = vmax.f32 %v371, 0.0
        %v496 = vmax.f32 %v376, 0.0
        %v497 = vmax.f32 %v379, 0.0
        %v498 = vmax.f32 %v384, 0.0
        %v499 = vmax.f32 %v387, 0.0
        %v500 = vmax.f32 %v392, 0.0
        %v501 = vmax.f32 %v395, 0.0
        %v502 = vmax.f32 %v400, 0.0
        %v503 = vmax.f32 %v403, 0.0
        %v504 = vmax.f32 %v408, 0.0
        %v505 = vmax.f32 %v411, 0.0
        %v506 = vmax.f32 %v416, 0.0
        %v507 = vmax.f32 %v419, 0.0
        %v508 = vmax.f32 %v424, 0.0
        %v509 = vmax.f32 %v427, 0.0
        %v510 = vmax.f32 %v432, 0.0
        %v511 = vmax.f32 %v435, 0.0
        %v512 = vmax.f32 %v440, 0.0
        %v513 = vmax.f32 %v443, 0.0
        %v514 = vmax.f32 %v448, 0.0
        %v515 = vmax.f32 %v451, 0.0
        %v516 = vmax.f32 %v456, 0.0
        %v517 = vmax.f32 %v459, 0.0
        %v518 = vmax.f32 %v464, 0.0
        %v519 = vmax.f32 %v467, 0.0
        %v520 = vmax.f32 %v472, 0.0
        %v521 = vmax.f32 %v475, 0.0
        %v522 = vmax.f32 %v480, 0.0
        %v523 = vmax.f32 %v483, 0.0
        %v524 = vmax.f32 %v488, 0.0
        %v525 = vmax.f32 %v491, 0.0
        %vm526 = vcmask 64512
        %527 = vst.msk [vmem:[#allocation2] sm:$0xff] %vm526, 0.0
        %528 = vst.msk [vmem:[#allocation2 + $0x8] sm:$0xff] %vm526, 0.0
        %vm529 = vcmask 58368
        %530 = vst.msk [vmem:[#allocation2 + $0x10] sm:$0x3] %vm529, 0.0
        %s531 = scalar_lea.vmem [#allocation2], 408
        %532 = vst.msk [vmem:[%s531] sm:$0xff] %vm526, 0.0
        %533 = vst.msk [vmem:[%s531 + $0x8] sm:$0xff] %vm526, 0.0
        %534 = vst.msk [vmem:[%s531 + $0x10] sm:$0x3] %vm529, 0.0
        %s535 = scalar_lea.vmem [#allocation2], 24
        %vm536 = vcmask 57344
        %537 = vst.msk [vmem:[%s535] sm:$0x1] %vm536, 0.0
        %538 = vst.msk [vmem:[%s535 + $0x18] sm:$0x1] %vm536, 0.0
        %539 = vst.msk [vmem:[%s535 + $0x30] sm:$0x1] %vm536, 0.0
        %540 = vst.msk [vmem:[%s535 + $0x48] sm:$0x1] %vm536, 0.0
        %541 = vst.msk [vmem:[%s535 + $0x60] sm:$0x1] %vm536, 0.0
        %542 = vst.msk [vmem:[%s535 + $0x78] sm:$0x1] %vm536, 0.0
        %543 = vst.msk [vmem:[%s535 + $0x90] sm:$0x1] %vm536, 0.0
        %544 = vst.msk [vmem:[%s535 + $0xa8] sm:$0x1] %vm536, 0.0
        %545 = vst.msk [vmem:[%s535 + $0xc0] sm:$0x1] %vm536, 0.0
        %546 = vst.msk [vmem:[%s535 + $0xd8] sm:$0x1] %vm536, 0.0
        %547 = vst.msk [vmem:[%s535 + $0xf0] sm:$0x1] %vm536, 0.0
        %548 = vst.msk [vmem:[%s535 + $0x108] sm:$0x1] %vm536, 0.0
        %549 = vst.msk [vmem:[%s535 + $0x120] sm:$0x1] %vm536, 0.0
        %550 = vst.msk [vmem:[%s535 + $0x138] sm:$0x1] %vm536, 0.0
        %551 = vst.msk [vmem:[%s535 + $0x150] sm:$0x1] %vm536, 0.0
        %552 = vst.msk [vmem:[%s535 + $0x168] sm:$0x1] %vm536, 0.0
        %553 = vst.msk [vmem:[%s535 + $0x11] sm:$0x1] %vm536, 0.0
        %554 = vst.msk [vmem:[%s535 + $0x29] sm:$0x1] %vm536, 0.0
        %555 = vst.msk [vmem:[%s535 + $0x41] sm:$0x1] %vm536, 0.0
        %556 = vst.msk [vmem:[%s535 + $0x59] sm:$0x1] %vm536, 0.0
        %557 = vst.msk [vmem:[%s535 + $0x71] sm:$0x1] %vm536, 0.0
        %558 = vst.msk [vmem:[%s535 + $0x89] sm:$0x1] %vm536, 0.0
        %559 = vst.msk [vmem:[%s535 + $0xa1] sm:$0x1] %vm536, 0.0
        %560 = vst.msk [vmem:[%s535 + $0xb9] sm:$0x1] %vm536, 0.0
        %561 = vst.msk [vmem:[%s535 + $0xd1] sm:$0x1] %vm536, 0.0
        %562 = vst.msk [vmem:[%s535 + $0xe9] sm:$0x1] %vm536, 0.0
        %563 = vst.msk [vmem:[%s535 + $0x101] sm:$0x1] %vm536, 0.0
        %564 = vst.msk [vmem:[%s535 + $0x119] sm:$0x1] %vm536, 0.0
        %565 = vst.msk [vmem:[%s535 + $0x131] sm:$0x1] %vm536, 0.0
        %566 = vst.msk [vmem:[%s535 + $0x149] sm:$0x1] %vm536, 0.0
        %567 = vst.msk [vmem:[%s535 + $0x161] sm:$0x1] %vm536, 0.0
        %568 = vst.msk [vmem:[%s535 + $0x179] sm:$0x1] %vm536, 0.0
        %569 = vst.msk [vmem:[%s535 + $0x1] sm:$0xff] %vm526, %v494
        %570 = vst.msk [vmem:[%s535 + $0x9] sm:$0xff] %vm526, %v495
        %571 = vst.msk [vmem:[%s535 + $0x19] sm:$0xff] %vm526, %v496
        %572 = vst.msk [vmem:[%s535 + $0x21] sm:$0xff] %vm526, %v497
        %573 = vst.msk [vmem:[%s535 + $0x31] sm:$0xff] %vm526, %v498
        %574 = vst.msk [vmem:[%s535 + $0x39] sm:$0xff] %vm526, %v499
        %575 = vst.msk [vmem:[%s535 + $0x49] sm:$0xff] %vm526, %v500
        %576 = vst.msk [vmem:[%s535 + $0x51] sm:$0xff] %vm526, %v501
        %577 = vst.msk [vmem:[%s535 + $0x61] sm:$0xff] %vm526, %v502
        %578 = vst.msk [vmem:[%s535 + $0x69] sm:$0xff] %vm526, %v503
        %579 = vst.msk [vmem:[%s535 + $0x79] sm:$0xff] %vm526, %v504
        %580 = vst.msk [vmem:[%s535 + $0x81] sm:$0xff] %vm526, %v505
        %581 = vst.msk [vmem:[%s535 + $0x91] sm:$0xff] %vm526, %v506
        %582 = vst.msk [vmem:[%s535 + $0x99] sm:$0xff] %vm526, %v507
        %583 = vst.msk [vmem:[%s535 + $0xa9] sm:$0xff] %vm526, %v508
        %584 = vst.msk [vmem:[%s535 + $0xb1] sm:$0xff] %vm526, %v509
        %585 = vst.msk [vmem:[%s535 + $0xc1] sm:$0xff] %vm526, %v510
        %586 = vst.msk [vmem:[%s535 + $0xc9] sm:$0xff] %vm526, %v511
        %587 = vst.msk [vmem:[%s535 + $0xd9] sm:$0xff] %vm526, %v512
        %588 = vst.msk [vmem:[%s535 + $0xe1] sm:$0xff] %vm526, %v513
        %589 = vst.msk [vmem:[%s535 + $0xf1] sm:$0xff] %vm526, %v514
        %590 = vst.msk [vmem:[%s535 + $0xf9] sm:$0xff] %vm526, %v515
        %591 = vst.msk [vmem:[%s535 + $0x109] sm:$0xff] %vm526, %v516
        %592 = vst.msk [vmem:[%s535 + $0x111] sm:$0xff] %vm526, %v517
        %593 = vst.msk [vmem:[%s535 + $0x121] sm:$0xff] %vm526, %v518
        %594 = vst.msk [vmem:[%s535 + $0x129] sm:$0xff] %vm526, %v519
        %595 = vst.msk [vmem:[%s535 + $0x139] sm:$0xff] %vm526, %v520
        %596 = vst.msk [vmem:[%s535 + $0x141] sm:$0xff] %vm526, %v521
        %597 = vst.msk [vmem:[%s535 + $0x151] sm:$0xff] %vm526, %v522
        %598 = vst.msk [vmem:[%s535 + $0x159] sm:$0xff] %vm526, %v523
        %599 = vst.msk [vmem:[%s535 + $0x169] sm:$0xff] %vm526, %v524
        %600 = vst.msk [vmem:[%s535 + $0x171] sm:$0xff] %vm526, %v525
        %v601 = vld [vmem:[#allocation2] sm:$0xff]
        %v602 = vld [vmem:[#allocation2 + $0x8] sm:$0xff]
        %v603 = vld [vmem:[#allocation2 + $0x18] sm:$0xff]
        %v604 = vld [vmem:[#allocation2 + $0x20] sm:$0xff]
        %v605 = vld [vmem:[#allocation2 + $0x30] sm:$0xff]
        %v606 = vld [vmem:[#allocation2 + $0x38] sm:$0xff]
        %v607 = vld [vmem:[#allocation2 + $0x48] sm:$0xff]
        %v608 = vld [vmem:[#allocation2 + $0x50] sm:$0xff]
        %v609 = vld [vmem:[#allocation2 + $0x60] sm:$0xff]
        %v610 = vld [vmem:[#allocation2 + $0x68] sm:$0xff]
        %v611 = vld [vmem:[#allocation2 + $0x78] sm:$0xff]
        %v612 = vld [vmem:[#allocation2 + $0x80] sm:$0xff]
        %v613 = vld [vmem:[#allocation2 + $0x90] sm:$0xff]
        %v614 = vld [vmem:[#allocation2 + $0x98] sm:$0xff]
        %v615 = vld [vmem:[#allocation2 + $0xa8] sm:$0xff]
        %v616 = vld [vmem:[#allocation2 + $0xb0] sm:$0xff]
        %v617 = vld [vmem:[#allocation2 + $0xc0] sm:$0xff]
        %v618 = vld [vmem:[#allocation2 + $0xc8] sm:$0xff]
        %v619 = vld [vmem:[#allocation2 + $0xd8] sm:$0xff]
        %v620 = vld [vmem:[#allocation2 + $0xe0] sm:$0xff]
        %v621 = vld [vmem:[#allocation2 + $0xf0] sm:$0xff]
        %v622 = vld [vmem:[#allocation2 + $0xf8] sm:$0xff]
        %v623 = vld [vmem:[#allocation2 + $0x108] sm:$0xff]
        %v624 = vld [vmem:[#allocation2 + $0x110] sm:$0xff]
        %v625 = vld [vmem:[#allocation2 + $0x120] sm:$0xff]
        %v626 = vld [vmem:[#allocation2 + $0x128] sm:$0xff]
        %v627 = vld [vmem:[#allocation2 + $0x138] sm:$0xff]
        %v628 = vld [vmem:[#allocation2 + $0x140] sm:$0xff]
        %v629 = vld [vmem:[#allocation2 + $0x150] sm:$0xff]
        %v630 = vld [vmem:[#allocation2 + $0x158] sm:$0xff]
        %v631 = vld [vmem:[#allocation2 + $0x168] sm:$0xff]
        %v632 = vld [vmem:[#allocation2 + $0x170] sm:$0xff]
        %v633 = vld [vmem:[#allocation2 + $0x1] sm:$0xff]
        %v634 = vld [vmem:[#allocation2 + $0x9] sm:$0xff]
        %v635 = vld [vmem:[#allocation2 + $0x19] sm:$0xff]
        %v636 = vld [vmem:[#allocation2 + $0x21] sm:$0xff]
        %v637 = vld [vmem:[#allocation2 + $0x31] sm:$0xff]
        %v638 = vld [vmem:[#allocation2 + $0x39] sm:$0xff]
        %v639 = vld [vmem:[#allocation2 + $0x49] sm:$0xff]
        %v640 = vld [vmem:[#allocation2 + $0x51] sm:$0xff]
        %v641 = vld [vmem:[#allocation2 + $0x61] sm:$0xff]
        %v642 = vld [vmem:[#allocation2 + $0x69] sm:$0xff]
        %v643 = vld [vmem:[#allocation2 + $0x79] sm:$0xff]
        %v644 = vld [vmem:[#allocation2 + $0x81] sm:$0xff]
        %v645 = vld [vmem:[#allocation2 + $0x91] sm:$0xff]
        %v646 = vld [vmem:[#allocation2 + $0x99] sm:$0xff]
        %v647 = vld [vmem:[#allocation2 + $0xa9] sm:$0xff]
        %v648 = vld [vmem:[#allocation2 + $0xb1] sm:$0xff]
        %v649 = vld [vmem:[#allocation2 + $0xc1] sm:$0xff]
        %v650 = vld [vmem:[#allocation2 + $0xc9] sm:$0xff]
        %v651 = vld [vmem:[#allocation2 + $0xd9] sm:$0xff]
        %v652 = vld [vmem:[#allocation2 + $0xe1] sm:$0xff]
        %v653 = vld [vmem:[#allocation2 + $0xf1] sm:$0xff]
        %v654 = vld [vmem:[#allocation2 + $0xf9] sm:$0xff]
        %v655 = vld [vmem:[#allocation2 + $0x109] sm:$0xff]
        %v656 = vld [vmem:[#allocation2 + $0x111] sm:$0xff]
        %v657 = vld [vmem:[#allocation2 + $0x121] sm:$0xff]
        %v658 = vld [vmem:[#allocation2 + $0x129] sm:$0xff]
        %v659 = vld [vmem:[#allocation2 + $0x139] sm:$0xff]
        %v660 = vld [vmem:[#allocation2 + $0x141] sm:$0xff]
        %v661 = vld [vmem:[#allocation2 + $0x151] sm:$0xff]
        %v662 = vld [vmem:[#allocation2 + $0x159] sm:$0xff]
        %v663 = vld [vmem:[#allocation2 + $0x169] sm:$0xff]
        %v664 = vld [vmem:[#allocation2 + $0x171] sm:$0xff]
        %v665 = vld [vmem:[#allocation2 + $0x2] sm:$0xff]
        %v666 = vld [vmem:[#allocation2 + $0xa] sm:$0xff]
        %v667 = vld [vmem:[#allocation2 + $0x1a] sm:$0xff]
        %v668 = vld [vmem:[#allocation2 + $0x22] sm:$0xff]
        %v669 = vld [vmem:[#allocation2 + $0x32] sm:$0xff]
        %v670 = vld [vmem:[#allocation2 + $0x3a] sm:$0xff]
        %v671 = vld [vmem:[#allocation2 + $0x4a] sm:$0xff]
        %v672 = vld [vmem:[#allocation2 + $0x52] sm:$0xff]
        %v673 = vld [vmem:[#allocation2 + $0x62] sm:$0xff]
        %v674 = vld [vmem:[#allocation2 + $0x6a] sm:$0xff]
        %v675 = vld [vmem:[#allocation2 + $0x7a] sm:$0xff]
        %v676 = vld [vmem:[#allocation2 + $0x82] sm:$0xff]
        %v677 = vld [vmem:[#allocation2 + $0x92] sm:$0xff]
        %v678 = vld [vmem:[#allocation2 + $0x9a] sm:$0xff]
        %v679 = vld [vmem:[#allocation2 + $0xaa] sm:$0xff]
        %v680 = vld [vmem:[#allocation2 + $0xb2] sm:$0xff]
        %v681 = vld [vmem:[#allocation2 + $0xc2] sm:$0xff]
        %v682 = vld [vmem:[#allocation2 + $0xca] sm:$0xff]
        %v683 = vld [vmem:[#allocation2 + $0xda] sm:$0xff]
        %v684 = vld [vmem:[#allocation2 + $0xe2] sm:$0xff]
        %v685 = vld [vmem:[#allocation2 + $0xf2] sm:$0xff]
        %v686 = vld [vmem:[#allocation2 + $0xfa] sm:$0xff]
        %v687 = vld [vmem:[#allocation2 + $0x10a] sm:$0xff]
        %v688 = vld [vmem:[#allocation2 + $0x112] sm:$0xff]
        %v689 = vld [vmem:[#allocation2 + $0x122] sm:$0xff]
        %v690 = vld [vmem:[#allocation2 + $0x12a] sm:$0xff]
        %v691 = vld [vmem:[#allocation2 + $0x13a] sm:$0xff]
        %v692 = vld [vmem:[#allocation2 + $0x142] sm:$0xff]
        %v693 = vld [vmem:[#allocation2 + $0x152] sm:$0xff]
        %v694 = vld [vmem:[#allocation2 + $0x15a] sm:$0xff]
        %v695 = vld [vmem:[#allocation2 + $0x16a] sm:$0xff]
        %v696 = vld [vmem:[#allocation2 + $0x172] sm:$0xff]
        %v697 = vld [vmem:[%s535] sm:$0xff]
        %v698 = vld [vmem:[%s535 + $0x8] sm:$0xff]
        %v699 = vld [vmem:[%s535 + $0x18] sm:$0xff]
        %v700 = vld [vmem:[%s535 + $0x20] sm:$0xff]
        %v701 = vld [vmem:[%s535 + $0x30] sm:$0xff]
        %v702 = vld [vmem:[%s535 + $0x38] sm:$0xff]
        %v703 = vld [vmem:[%s535 + $0x48] sm:$0xff]
        %v704 = vld [vmem:[%s535 + $0x50] sm:$0xff]
        %v705 = vld [vmem:[%s535 + $0x60] sm:$0xff]
        %v706 = vld [vmem:[%s535 + $0x68] sm:$0xff]
        %v707 = vld [vmem:[%s535 + $0x78] sm:$0xff]
        %v708 = vld [vmem:[%s535 + $0x80] sm:$0xff]
        %v709 = vld [vmem:[%s535 + $0x90] sm:$0xff]
        %v710 = vld [vmem:[%s535 + $0x98] sm:$0xff]
        %v711 = vld [vmem:[%s535 + $0xa8] sm:$0xff]
        %v712 = vld [vmem:[%s535 + $0xb0] sm:$0xff]
        %v713 = vld [vmem:[%s535 + $0xc0] sm:$0xff]
        %v714 = vld [vmem:[%s535 + $0xc8] sm:$0xff]
        %v715 = vld [vmem:[%s535 + $0xd8] sm:$0xff]
        %v716 = vld [vmem:[%s535 + $0xe0] sm:$0xff]
        %v717 = vld [vmem:[%s535 + $0xf0] sm:$0xff]
        %v718 = vld [vmem:[%s535 + $0xf8] sm:$0xff]
        %v719 = vld [vmem:[%s535 + $0x108] sm:$0xff]
        %v720 = vld [vmem:[%s535 + $0x110] sm:$0xff]
        %v721 = vld [vmem:[%s535 + $0x120] sm:$0xff]
        %v722 = vld [vmem:[%s535 + $0x128] sm:$0xff]
        %v723 = vld [vmem:[%s535 + $0x138] sm:$0xff]
        %v724 = vld [vmem:[%s535 + $0x140] sm:$0xff]
        %v725 = vld [vmem:[%s535 + $0x150] sm:$0xff]
        %v726 = vld [vmem:[%s535 + $0x158] sm:$0xff]
        %v727 = vld [vmem:[%s535 + $0x168] sm:$0xff]
        %v728 = vld [vmem:[%s535 + $0x170] sm:$0xff]
        %v729 = vld [vmem:[%s535 + $0x1] sm:$0xff]
        %v730 = vld [vmem:[%s535 + $0x9] sm:$0xff]
        %v731 = vld [vmem:[%s535 + $0x19] sm:$0xff]
        %v732 = vld [vmem:[%s535 + $0x21] sm:$0xff]
        %v733 = vld [vmem:[%s535 + $0x31] sm:$0xff]
        %v734 = vld [vmem:[%s535 + $0x39] sm:$0xff]
        %v735 = vld [vmem:[%s535 + $0x49] sm:$0xff]
        %v736 = vld [vmem:[%s535 + $0x51] sm:$0xff]
        %v737 = vld [vmem:[%s535 + $0x61] sm:$0xff]
        %v738 = vld [vmem:[%s535 + $0x69] sm:$0xff]
        %v739 = vld [vmem:[%s535 + $0x79] sm:$0xff]
        %v740 = vld [vmem:[%s535 + $0x81] sm:$0xff]
        %v741 = vld [vmem:[%s535 + $0x91] sm:$0xff]
        %v742 = vld [vmem:[%s535 + $0x99] sm:$0xff]
        %v743 = vld [vmem:[%s535 + $0xa9] sm:$0xff]
        %v744 = vld [vmem:[%s535 + $0xb1] sm:$0xff]
        %v745 = vld [vmem:[%s535 + $0xc1] sm:$0xff]
        %v746 = vld [vmem:[%s535 + $0xc9] sm:$0xff]
        %v747 = vld [vmem:[%s535 + $0xd9] sm:$0xff]
        %v748 = vld [vmem:[%s535 + $0xe1] sm:$0xff]
        %v749 = vld [vmem:[%s535 + $0xf1] sm:$0xff]
        %v750 = vld [vmem:[%s535 + $0xf9] sm:$0xff]
        %v751 = vld [vmem:[%s535 + $0x109] sm:$0xff]
        %v752 = vld [vmem:[%s535 + $0x111] sm:$0xff]
        %v753 = vld [vmem:[%s535 + $0x121] sm:$0xff]
        %v754 = vld [vmem:[%s535 + $0x129] sm:$0xff]
        %v755 = vld [vmem:[%s535 + $0x139] sm:$0xff]
        %v756 = vld [vmem:[%s535 + $0x141] sm:$0xff]
        %v757 = vld [vmem:[%s535 + $0x151] sm:$0xff]
        %v758 = vld [vmem:[%s535 + $0x159] sm:$0xff]
        %v759 = vld [vmem:[%s535 + $0x169] sm:$0xff]
        %v760 = vld [vmem:[%s535 + $0x171] sm:$0xff]
        %v761 = vld [vmem:[%s535 + $0x2] sm:$0xff]
        %v762 = vld [vmem:[%s535 + $0xa] sm:$0xff]
        %v763 = vld [vmem:[%s535 + $0x1a] sm:$0xff]
        %v764 = vld [vmem:[%s535 + $0x22] sm:$0xff]
        %v765 = vld [vmem:[%s535 + $0x32] sm:$0xff]
        %v766 = vld [vmem:[%s535 + $0x3a] sm:$0xff]
        %v767 = vld [vmem:[%s535 + $0x4a] sm:$0xff]
        %v768 = vld [vmem:[%s535 + $0x52] sm:$0xff]
        %v769 = vld [vmem:[%s535 + $0x62] sm:$0xff]
        %v770 = vld [vmem:[%s535 + $0x6a] sm:$0xff]
        %v771 = vld [vmem:[%s535 + $0x7a] sm:$0xff]
        %v772 = vld [vmem:[%s535 + $0x82] sm:$0xff]
        %v773 = vld [vmem:[%s535 + $0x92] sm:$0xff]
        %v774 = vld [vmem:[%s535 + $0x9a] sm:$0xff]
        %v775 = vld [vmem:[%s535 + $0xaa] sm:$0xff]
        %v776 = vld [vmem:[%s535 + $0xb2] sm:$0xff]
        %v777 = vld [vmem:[%s535 + $0xc2] sm:$0xff]
        %v778 = vld [vmem:[%s535 + $0xca] sm:$0xff]
        %v779 = vld [vmem:[%s535 + $0xda] sm:$0xff]
        %v780 = vld [vmem:[%s535 + $0xe2] sm:$0xff]
        %v781 = vld [vmem:[%s535 + $0xf2] sm:$0xff]
        %v782 = vld [vmem:[%s535 + $0xfa] sm:$0xff]
        %v783 = vld [vmem:[%s535 + $0x10a] sm:$0xff]
        %v784 = vld [vmem:[%s535 + $0x112] sm:$0xff]
        %v785 = vld [vmem:[%s535 + $0x122] sm:$0xff]
        %v786 = vld [vmem:[%s535 + $0x12a] sm:$0xff]
        %v787 = vld [vmem:[%s535 + $0x13a] sm:$0xff]
        %v788 = vld [vmem:[%s535 + $0x142] sm:$0xff]
        %v789 = vld [vmem:[%s535 + $0x152] sm:$0xff]
        %v790 = vld [vmem:[%s535 + $0x15a] sm:$0xff]
        %v791 = vld [vmem:[%s535 + $0x16a] sm:$0xff]
        %v792 = vld [vmem:[%s535 + $0x172] sm:$0xff]
        %s793 = scalar_lea.vmem [#allocation2], 48
        %v794 = vld [vmem:[%s793] sm:$0xff]
        %v795 = vld [vmem:[%s793 + $0x8] sm:$0xff]
        %v796 = vld [vmem:[%s793 + $0x18] sm:$0xff]
        %v797 = vld [vmem:[%s793 + $0x20] sm:$0xff]
        %v798 = vld [vmem:[%s793 + $0x30] sm:$0xff]
        %v799 = vld [vmem:[%s793 + $0x38] sm:$0xff]
        %v800 = vld [vmem:[%s793 + $0x48] sm:$0xff]
        %v801 = vld [vmem:[%s793 + $0x50] sm:$0xff]
        %v802 = vld [vmem:[%s793 + $0x60] sm:$0xff]
        %v803 = vld [vmem:[%s793 + $0x68] sm:$0xff]
        %v804 = vld [vmem:[%s793 + $0x78] sm:$0xff]
        %v805 = vld [vmem:[%s793 + $0x80] sm:$0xff]
        %v806 = vld [vmem:[%s793 + $0x90] sm:$0xff]
        %v807 = vld [vmem:[%s793 + $0x98] sm:$0xff]
        %v808 = vld [vmem:[%s793 + $0xa8] sm:$0xff]
        %v809 = vld [vmem:[%s793 + $0xb0] sm:$0xff]
        %v810 = vld [vmem:[%s793 + $0xc0] sm:$0xff]
        %v811 = vld [vmem:[%s793 + $0xc8] sm:$0xff]
        %v812 = vld [vmem:[%s793 + $0xd8] sm:$0xff]
        %v813 = vld [vmem:[%s793 + $0xe0] sm:$0xff]
        %v814 = vld [vmem:[%s793 + $0xf0] sm:$0xff]
        %v815 = vld [vmem:[%s793 + $0xf8] sm:$0xff]
        %v816 = vld [vmem:[%s793 + $0x108] sm:$0xff]
        %v817 = vld [vmem:[%s793 + $0x110] sm:$0xff]
        %v818 = vld [vmem:[%s793 + $0x120] sm:$0xff]
        %v819 = vld [vmem:[%s793 + $0x128] sm:$0xff]
        %v820 = vld [vmem:[%s793 + $0x138] sm:$0xff]
        %v821 = vld [vmem:[%s793 + $0x140] sm:$0xff]
        %v822 = vld [vmem:[%s793 + $0x150] sm:$0xff]
        %v823 = vld [vmem:[%s793 + $0x158] sm:$0xff]
        %v824 = vld [vmem:[%s793 + $0x168] sm:$0xff]
        %v825 = vld [vmem:[%s793 + $0x170] sm:$0xff]
        %v826 = vld [vmem:[%s793 + $0x1] sm:$0xff]
        %v827 = vld [vmem:[%s793 + $0x9] sm:$0xff]
        %v828 = vld [vmem:[%s793 + $0x19] sm:$0xff]
        %v829 = vld [vmem:[%s793 + $0x21] sm:$0xff]
        %v830 = vld [vmem:[%s793 + $0x31] sm:$0xff]
        %v831 = vld [vmem:[%s793 + $0x39] sm:$0xff]
        %v832 = vld [vmem:[%s793 + $0x49] sm:$0xff]
        %v833 = vld [vmem:[%s793 + $0x51] sm:$0xff]
        %v834 = vld [vmem:[%s793 + $0x61] sm:$0xff]
        %v835 = vld [vmem:[%s793 + $0x69] sm:$0xff]
        %v836 = vld [vmem:[%s793 + $0x79] sm:$0xff]
        %v837 = vld [vmem:[%s793 + $0x81] sm:$0xff]
        %v838 = vld [vmem:[%s793 + $0x91] sm:$0xff]
        %v839 = vld [vmem:[%s793 + $0x99] sm:$0xff]
        %v840 = vld [vmem:[%s793 + $0xa9] sm:$0xff]
        %v841 = vld [vmem:[%s793 + $0xb1] sm:$0xff]
        %v842 = vld [vmem:[%s793 + $0xc1] sm:$0xff]
        %v843 = vld [vmem:[%s793 + $0xc9] sm:$0xff]
        %v844 = vld [vmem:[%s793 + $0xd9] sm:$0xff]
        %v845 = vld [vmem:[%s793 + $0xe1] sm:$0xff]
        %v846 = vld [vmem:[%s793 + $0xf1] sm:$0xff]
        %v847 = vld [vmem:[%s793 + $0xf9] sm:$0xff]
        %v848 = vld [vmem:[%s793 + $0x109] sm:$0xff]
        %v849 = vld [vmem:[%s793 + $0x111] sm:$0xff]
        %v850 = vld [vmem:[%s793 + $0x121] sm:$0xff]
        %v851 = vld [vmem:[%s793 + $0x129] sm:$0xff]
        %v852 = vld [vmem:[%s793 + $0x139] sm:$0xff]
        %v853 = vld [vmem:[%s793 + $0x141] sm:$0xff]
        %v854 = vld [vmem:[%s793 + $0x151] sm:$0xff]
        %v855 = vld [vmem:[%s793 + $0x159] sm:$0xff]
        %v856 = vld [vmem:[%s793 + $0x169] sm:$0xff]
        %v857 = vld [vmem:[%s793 + $0x171] sm:$0xff]
        %v858 = vld [vmem:[%s793 + $0x2] sm:$0xff]
        %v859 = vld [vmem:[%s793 + $0xa] sm:$0xff]
        %v860 = vld [vmem:[%s793 + $0x1a] sm:$0xff]
        %v861 = vld [vmem:[%s793 + $0x22] sm:$0xff]
        %v862 = vld [vmem:[%s793 + $0x32] sm:$0xff]
        %v863 = vld [vmem:[%s793 + $0x3a] sm:$0xff]
        %v864 = vld [vmem:[%s793 + $0x4a] sm:$0xff]
        %v865 = vld [vmem:[%s793 + $0x52] sm:$0xff]
        %v866 = vld [vmem:[%s793 + $0x62] sm:$0xff]
        %v867 = vld [vmem:[%s793 + $0x6a] sm:$0xff]
        %v868 = vld [vmem:[%s793 + $0x7a] sm:$0xff]
        %v869 = vld [vmem:[%s793 + $0x82] sm:$0xff]
        %v870 = vld [vmem:[%s793 + $0x92] sm:$0xff]
        %v871 = vld [vmem:[%s793 + $0x9a] sm:$0xff]
        %v872 = vld [vmem:[%s793 + $0xaa] sm:$0xff]
        %v873 = vld [vmem:[%s793 + $0xb2] sm:$0xff]
        %v874 = vld [vmem:[%s793 + $0xc2] sm:$0xff]
        %v875 = vld [vmem:[%s793 + $0xca] sm:$0xff]
        %v876 = vld [vmem:[%s793 + $0xda] sm:$0xff]
        %v877 = vld [vmem:[%s793 + $0xe2] sm:$0xff]
        %v878 = vld [vmem:[%s793 + $0xf2] sm:$0xff]
        %v879 = vld [vmem:[%s793 + $0xfa] sm:$0xff]
        %v880 = vld [vmem:[%s793 + $0x10a] sm:$0xff]
        %v881 = vld [vmem:[%s793 + $0x112] sm:$0xff]
        %v882 = vld [vmem:[%s793 + $0x122] sm:$0xff]
        %v883 = vld [vmem:[%s793 + $0x12a] sm:$0xff]
        %v884 = vld [vmem:[%s793 + $0x13a] sm:$0xff]
        %v885 = vld [vmem:[%s793 + $0x142] sm:$0xff]
        %v886 = vld [vmem:[%s793 + $0x152] sm:$0xff]
        %v887 = vld [vmem:[%s793 + $0x15a] sm:$0xff]
        %v888 = vld [vmem:[%s793 + $0x16a] sm:$0xff]
        %v889 = vld [vmem:[%s793 + $0x172] sm:$0xff]
        %922 = vrot.lane.b32.xlu0 %v633, 8
        %v923 = vpop.permute.xlu0 %922
        %924 = vrot.lane.b32.xlu0 %v634, 8
        %v925 = vpop.permute.xlu0 %924
        %926 = vrot.lane.b32.xlu0 %v635, 8
        %v927 = vpop.permute.xlu0 %926
        %928 = vrot.lane.b32.xlu0 %v636, 8
        %v929 = vpop.permute.xlu0 %928
        %930 = vrot.lane.b32.xlu0 %v637, 8
        %v931 = vpop.permute.xlu0 %930
        %932 = vrot.lane.b32.xlu0 %v638, 8
        %v933 = vpop.permute.xlu0 %932
        %934 = vrot.lane.b32.xlu0 %v639, 8
        %v935 = vpop.permute.xlu0 %934
        %936 = vrot.lane.b32.xlu0 %v640, 8
        %v937 = vpop.permute.xlu0 %936
        %938 = vrot.lane.b32.xlu0 %v641, 8
        %v939 = vpop.permute.xlu0 %938
        %940 = vrot.lane.b32.xlu0 %v642, 8
        %v941 = vpop.permute.xlu0 %940
        %942 = vrot.lane.b32.xlu0 %v643, 8
        %v943 = vpop.permute.xlu0 %942
        %944 = vrot.lane.b32.xlu0 %v644, 8
        %v945 = vpop.permute.xlu0 %944
        %946 = vrot.lane.b32.xlu0 %v645, 8
        %v947 = vpop.permute.xlu0 %946
        %948 = vrot.lane.b32.xlu0 %v646, 8
        %v949 = vpop.permute.xlu0 %948
        %950 = vrot.lane.b32.xlu0 %v647, 8
        %v951 = vpop.permute.xlu0 %950
        %952 = vrot.lane.b32.xlu0 %v648, 8
        %v953 = vpop.permute.xlu0 %952
        %954 = vrot.lane.b32.xlu0 %v649, 8
        %v955 = vpop.permute.xlu0 %954
        %956 = vrot.lane.b32.xlu0 %v650, 8
        %v957 = vpop.permute.xlu0 %956
        %958 = vrot.lane.b32.xlu0 %v651, 8
        %v959 = vpop.permute.xlu0 %958
        %960 = vrot.lane.b32.xlu0 %v652, 8
        %v961 = vpop.permute.xlu0 %960
        %962 = vrot.lane.b32.xlu0 %v653, 8
        %v963 = vpop.permute.xlu0 %962
        %964 = vrot.lane.b32.xlu0 %v654, 8
        %v965 = vpop.permute.xlu0 %964
        %966 = vrot.lane.b32.xlu0 %v655, 8
        %v967 = vpop.permute.xlu0 %966
        %968 = vrot.lane.b32.xlu0 %v656, 8
        %v969 = vpop.permute.xlu0 %968
        %970 = vrot.lane.b32.xlu0 %v657, 8
        %v971 = vpop.permute.xlu0 %970
        %972 = vrot.lane.b32.xlu0 %v658, 8
        %v973 = vpop.permute.xlu0 %972
        %974 = vrot.lane.b32.xlu0 %v659, 8
        %v975 = vpop.permute.xlu0 %974
        %976 = vrot.lane.b32.xlu0 %v660, 8
        %v977 = vpop.permute.xlu0 %976
        %978 = vrot.lane.b32.xlu0 %v661, 8
        %v979 = vpop.permute.xlu0 %978
        %980 = vrot.lane.b32.xlu0 %v662, 8
        %v981 = vpop.permute.xlu0 %980
        %982 = vrot.lane.b32.xlu0 %v663, 8
        %v983 = vpop.permute.xlu0 %982
        %984 = vrot.lane.b32.xlu0 %v664, 8
        %v985 = vpop.permute.xlu0 %984
        %1050 = vrot.lane.b32.xlu0 %v665, 16
        %v1051 = vpop.permute.xlu0 %1050
        %1052 = vrot.lane.b32.xlu0 %v666, 16
        %v1053 = vpop.permute.xlu0 %1052
        %1054 = vrot.lane.b32.xlu0 %v667, 16
        %v1055 = vpop.permute.xlu0 %1054
        %1056 = vrot.lane.b32.xlu0 %v668, 16
        %v1057 = vpop.permute.xlu0 %1056
        %1058 = vrot.lane.b32.xlu0 %v669, 16
        %v1059 = vpop.permute.xlu0 %1058
        %1060 = vrot.lane.b32.xlu0 %v670, 16
        %v1061 = vpop.permute.xlu0 %1060
        %1062 = vrot.lane.b32.xlu0 %v671, 16
        %v1063 = vpop.permute.xlu0 %1062
        %1064 = vrot.lane.b32.xlu0 %v672, 16
        %v1065 = vpop.permute.xlu0 %1064
        %1066 = vrot.lane.b32.xlu0 %v673, 16
        %v1067 = vpop.permute.xlu0 %1066
        %1068 = vrot.lane.b32.xlu0 %v674, 16
        %v1069 = vpop.permute.xlu0 %1068
        %1070 = vrot.lane.b32.xlu0 %v675, 16
        %v1071 = vpop.permute.xlu0 %1070
        %1072 = vrot.lane.b32.xlu0 %v676, 16
        %v1073 = vpop.permute.xlu0 %1072
        %1074 = vrot.lane.b32.xlu0 %v677, 16
        %v1075 = vpop.permute.xlu0 %1074
        %1076 = vrot.lane.b32.xlu0 %v678, 16
        %v1077 = vpop.permute.xlu0 %1076
        %1078 = vrot.lane.b32.xlu0 %v679, 16
        %v1079 = vpop.permute.xlu0 %1078
        %1080 = vrot.lane.b32.xlu0 %v680, 16
        %v1081 = vpop.permute.xlu0 %1080
        %1082 = vrot.lane.b32.xlu0 %v681, 16
        %v1083 = vpop.permute.xlu0 %1082
        %1084 = vrot.lane.b32.xlu0 %v682, 16
        %v1085 = vpop.permute.xlu0 %1084
        %1086 = vrot.lane.b32.xlu0 %v683, 16
        %v1087 = vpop.permute.xlu0 %1086
        %1088 = vrot.lane.b32.xlu0 %v684, 16
        %v1089 = vpop.permute.xlu0 %1088
        %1090 = vrot.lane.b32.xlu0 %v685, 16
        %v1091 = vpop.permute.xlu0 %1090
        %1092 = vrot.lane.b32.xlu0 %v686, 16
        %v1093 = vpop.permute.xlu0 %1092
        %1094 = vrot.lane.b32.xlu0 %v687, 16
        %v1095 = vpop.permute.xlu0 %1094
        %1096 = vrot.lane.b32.xlu0 %v688, 16
        %v1097 = vpop.permute.xlu0 %1096
        %1098 = vrot.lane.b32.xlu0 %v689, 16
        %v1099 = vpop.permute.xlu0 %1098
        %1100 = vrot.lane.b32.xlu0 %v690, 16
        %v1101 = vpop.permute.xlu0 %1100
        %1102 = vrot.lane.b32.xlu0 %v691, 16
        %v1103 = vpop.permute.xlu0 %1102
        %1104 = vrot.lane.b32.xlu0 %v692, 16
        %v1105 = vpop.permute.xlu0 %1104
        %1106 = vrot.lane.b32.xlu0 %v693, 16
        %v1107 = vpop.permute.xlu0 %1106
        %1108 = vrot.lane.b32.xlu0 %v694, 16
        %v1109 = vpop.permute.xlu0 %1108
        %1110 = vrot.lane.b32.xlu0 %v695, 16
        %v1111 = vpop.permute.xlu0 %1110
        %1112 = vrot.lane.b32.xlu0 %v696, 16
        %v1113 = vpop.permute.xlu0 %1112
        %1178 = vrot.lane.b32.xlu0 %v697, 24
        %v1179 = vpop.permute.xlu0 %1178
        %1180 = vrot.lane.b32.xlu0 %v698, 24
        %v1181 = vpop.permute.xlu0 %1180
        %1182 = vrot.lane.b32.xlu0 %v699, 24
        %v1183 = vpop.permute.xlu0 %1182
        %1184 = vrot.lane.b32.xlu0 %v700, 24
        %v1185 = vpop.permute.xlu0 %1184
        %1186 = vrot.lane.b32.xlu0 %v701, 24
        %v1187 = vpop.permute.xlu0 %1186
        %1188 = vrot.lane.b32.xlu0 %v702, 24
        %v1189 = vpop.permute.xlu0 %1188
        %1190 = vrot.lane.b32.xlu0 %v703, 24
        %v1191 = vpop.permute.xlu0 %1190
        %1192 = vrot.lane.b32.xlu0 %v704, 24
        %v1193 = vpop.permute.xlu0 %1192
        %1194 = vrot.lane.b32.xlu0 %v705, 24
        %v1195 = vpop.permute.xlu0 %1194
        %1196 = vrot.lane.b32.xlu0 %v706, 24
        %v1197 = vpop.permute.xlu0 %1196
        %1198 = vrot.lane.b32.xlu0 %v707, 24
        %v1199 = vpop.permute.xlu0 %1198
        %1200 = vrot.lane.b32.xlu0 %v708, 24
        %v1201 = vpop.permute.xlu0 %1200
        %1202 = vrot.lane.b32.xlu0 %v709, 24
        %v1203 = vpop.permute.xlu0 %1202
        %1204 = vrot.lane.b32.xlu0 %v710, 24
        %v1205 = vpop.permute.xlu0 %1204
        %1206 = vrot.lane.b32.xlu0 %v711, 24
        %v1207 = vpop.permute.xlu0 %1206
        %1208 = vrot.lane.b32.xlu0 %v712, 24
        %v1209 = vpop.permute.xlu0 %1208
        %1210 = vrot.lane.b32.xlu0 %v713, 24
        %v1211 = vpop.permute.xlu0 %1210
        %1212 = vrot.lane.b32.xlu0 %v714, 24
        %v1213 = vpop.permute.xlu0 %1212
        %1214 = vrot.lane.b32.xlu0 %v715, 24
        %v1215 = vpop.permute.xlu0 %1214
        %1216 = vrot.lane.b32.xlu0 %v716, 24
        %v1217 = vpop.permute.xlu0 %1216
        %1218 = vrot.lane.b32.xlu0 %v717, 24
        %v1219 = vpop.permute.xlu0 %1218
        %1220 = vrot.lane.b32.xlu0 %v718, 24
        %v1221 = vpop.permute.xlu0 %1220
        %1222 = vrot.lane.b32.xlu0 %v719, 24
        %v1223 = vpop.permute.xlu0 %1222
        %1224 = vrot.lane.b32.xlu0 %v720, 24
        %v1225 = vpop.permute.xlu0 %1224
        %1226 = vrot.lane.b32.xlu0 %v721, 24
        %v1227 = vpop.permute.xlu0 %1226
        %1228 = vrot.lane.b32.xlu0 %v722, 24
        %v1229 = vpop.permute.xlu0 %1228
        %1230 = vrot.lane.b32.xlu0 %v723, 24
        %v1231 = vpop.permute.xlu0 %1230
        %1232 = vrot.lane.b32.xlu0 %v724, 24
        %v1233 = vpop.permute.xlu0 %1232
        %1234 = vrot.lane.b32.xlu0 %v725, 24
        %v1235 = vpop.permute.xlu0 %1234
        %1236 = vrot.lane.b32.xlu0 %v726, 24
        %v1237 = vpop.permute.xlu0 %1236
        %1238 = vrot.lane.b32.xlu0 %v727, 24
        %v1239 = vpop.permute.xlu0 %1238
        %1240 = vrot.lane.b32.xlu0 %v728, 24
        %v1241 = vpop.permute.xlu0 %1240
        %1306 = vrot.lane.b32.xlu0 %v729, 32
        %v1307 = vpop.permute.xlu0 %1306
        %1308 = vrot.lane.b32.xlu0 %v730, 32
        %v1309 = vpop.permute.xlu0 %1308
        %1310 = vrot.lane.b32.xlu0 %v731, 32
        %v1311 = vpop.permute.xlu0 %1310
        %1312 = vrot.lane.b32.xlu0 %v732, 32
        %v1313 = vpop.permute.xlu0 %1312
        %1314 = vrot.lane.b32.xlu0 %v733, 32
        %v1315 = vpop.permute.xlu0 %1314
        %1316 = vrot.lane.b32.xlu0 %v734, 32
        %v1317 = vpop.permute.xlu0 %1316
        %1318 = vrot.lane.b32.xlu0 %v735, 32
        %v1319 = vpop.permute.xlu0 %1318
        %1320 = vrot.lane.b32.xlu0 %v736, 32
        %v1321 = vpop.permute.xlu0 %1320
        %1322 = vrot.lane.b32.xlu0 %v737, 32
        %v1323 = vpop.permute.xlu0 %1322
        %1324 = vrot.lane.b32.xlu0 %v738, 32
        %v1325 = vpop.permute.xlu0 %1324
        %1326 = vrot.lane.b32.xlu0 %v739, 32
        %v1327 = vpop.permute.xlu0 %1326
        %1328 = vrot.lane.b32.xlu0 %v740, 32
        %v1329 = vpop.permute.xlu0 %1328
        %1330 = vrot.lane.b32.xlu0 %v741, 32
        %v1331 = vpop.permute.xlu0 %1330
        %1332 = vrot.lane.b32.xlu0 %v742, 32
        %v1333 = vpop.permute.xlu0 %1332
        %1334 = vrot.lane.b32.xlu0 %v743, 32
        %v1335 = vpop.permute.xlu0 %1334
        %1336 = vrot.lane.b32.xlu0 %v744, 32
        %v1337 = vpop.permute.xlu0 %1336
        %1338 = vrot.lane.b32.xlu0 %v745, 32
        %v1339 = vpop.permute.xlu0 %1338
        %1340 = vrot.lane.b32.xlu0 %v746, 32
        %v1341 = vpop.permute.xlu0 %1340
        %1342 = vrot.lane.b32.xlu0 %v747, 32
        %v1343 = vpop.permute.xlu0 %1342
        %1344 = vrot.lane.b32.xlu0 %v748, 32
        %v1345 = vpop.permute.xlu0 %1344
        %1346 = vrot.lane.b32.xlu0 %v749, 32
        %v1347 = vpop.permute.xlu0 %1346
        %1348 = vrot.lane.b32.xlu0 %v750, 32
        %v1349 = vpop.permute.xlu0 %1348
        %1350 = vrot.lane.b32.xlu0 %v751, 32
        %v1351 = vpop.permute.xlu0 %1350
        %1352 = vrot.lane.b32.xlu0 %v752, 32
        %v1353 = vpop.permute.xlu0 %1352
        %1354 = vrot.lane.b32.xlu0 %v753, 32
        %v1355 = vpop.permute.xlu0 %1354
        %1356 = vrot.lane.b32.xlu0 %v754, 32
        %v1357 = vpop.permute.xlu0 %1356
        %1358 = vrot.lane.b32.xlu0 %v755, 32
        %v1359 = vpop.permute.xlu0 %1358
        %1360 = vrot.lane.b32.xlu0 %v756, 32
        %v1361 = vpop.permute.xlu0 %1360
        %1362 = vrot.lane.b32.xlu0 %v757, 32
        %v1363 = vpop.permute.xlu0 %1362
        %1364 = vrot.lane.b32.xlu0 %v758, 32
        %v1365 = vpop.permute.xlu0 %1364
        %1366 = vrot.lane.b32.xlu0 %v759, 32
        %v1367 = vpop.permute.xlu0 %1366
        %1368 = vrot.lane.b32.xlu0 %v760, 32
        %v1369 = vpop.permute.xlu0 %1368
        %1434 = vrot.lane.b32.xlu0 %v761, 40
        %v1435 = vpop.permute.xlu0 %1434
        %1436 = vrot.lane.b32.xlu0 %v762, 40
        %v1437 = vpop.permute.xlu0 %1436
        %1438 = vrot.lane.b32.xlu0 %v763, 40
        %v1439 = vpop.permute.xlu0 %1438
        %1440 = vrot.lane.b32.xlu0 %v764, 40
        %v1441 = vpop.permute.xlu0 %1440
        %1442 = vrot.lane.b32.xlu0 %v765, 40
        %v1443 = vpop.permute.xlu0 %1442
        %1444 = vrot.lane.b32.xlu0 %v766, 40
        %v1445 = vpop.permute.xlu0 %1444
        %1446 = vrot.lane.b32.xlu0 %v767, 40
        %v1447 = vpop.permute.xlu0 %1446
        %1448 = vrot.lane.b32.xlu0 %v768, 40
        %v1449 = vpop.permute.xlu0 %1448
        %1450 = vrot.lane.b32.xlu0 %v769, 40
        %v1451 = vpop.permute.xlu0 %1450
        %1452 = vrot.lane.b32.xlu0 %v770, 40
        %v1453 = vpop.permute.xlu0 %1452
        %1454 = vrot.lane.b32.xlu0 %v771, 40
        %v1455 = vpop.permute.xlu0 %1454
        %1456 = vrot.lane.b32.xlu0 %v772, 40
        %v1457 = vpop.permute.xlu0 %1456
        %1458 = vrot.lane.b32.xlu0 %v773, 40
        %v1459 = vpop.permute.xlu0 %1458
        %1460 = vrot.lane.b32.xlu0 %v774, 40
        %v1461 = vpop.permute.xlu0 %1460
        %1462 = vrot.lane.b32.xlu0 %v775, 40
        %v1463 = vpop.permute.xlu0 %1462
        %1464 = vrot.lane.b32.xlu0 %v776, 40
        %v1465 = vpop.permute.xlu0 %1464
        %1466 = vrot.lane.b32.xlu0 %v777, 40
        %v1467 = vpop.permute.xlu0 %1466
        %1468 = vrot.lane.b32.xlu0 %v778, 40
        %v1469 = vpop.permute.xlu0 %1468
        %1470 = vrot.lane.b32.xlu0 %v779, 40
        %v1471 = vpop.permute.xlu0 %1470
        %1472 = vrot.lane.b32.xlu0 %v780, 40
        %v1473 = vpop.permute.xlu0 %1472
        %1474 = vrot.lane.b32.xlu0 %v781, 40
        %v1475 = vpop.permute.xlu0 %1474
        %1476 = vrot.lane.b32.xlu0 %v782, 40
        %v1477 = vpop.permute.xlu0 %1476
        %1478 = vrot.lane.b32.xlu0 %v783, 40
        %v1479 = vpop.permute.xlu0 %1478
        %1480 = vrot.lane.b32.xlu0 %v784, 40
        %v1481 = vpop.permute.xlu0 %1480
        %1482 = vrot.lane.b32.xlu0 %v785, 40
        %v1483 = vpop.permute.xlu0 %1482
        %1484 = vrot.lane.b32.xlu0 %v786, 40
        %v1485 = vpop.permute.xlu0 %1484
        %1486 = vrot.lane.b32.xlu0 %v787, 40
        %v1487 = vpop.permute.xlu0 %1486
        %1488 = vrot.lane.b32.xlu0 %v788, 40
        %v1489 = vpop.permute.xlu0 %1488
        %1490 = vrot.lane.b32.xlu0 %v789, 40
        %v1491 = vpop.permute.xlu0 %1490
        %1492 = vrot.lane.b32.xlu0 %v790, 40
        %v1493 = vpop.permute.xlu0 %1492
        %1494 = vrot.lane.b32.xlu0 %v791, 40
        %v1495 = vpop.permute.xlu0 %1494
        %1496 = vrot.lane.b32.xlu0 %v792, 40
        %v1497 = vpop.permute.xlu0 %1496
        %1562 = vrot.lane.b32.xlu0 %v794, 48
        %v1563 = vpop.permute.xlu0 %1562
        %1564 = vrot.lane.b32.xlu0 %v795, 48
        %v1565 = vpop.permute.xlu0 %1564
        %1566 = vrot.lane.b32.xlu0 %v796, 48
        %v1567 = vpop.permute.xlu0 %1566
        %1568 = vrot.lane.b32.xlu0 %v797, 48
        %v1569 = vpop.permute.xlu0 %1568
        %1570 = vrot.lane.b32.xlu0 %v798, 48
        %v1571 = vpop.permute.xlu0 %1570
        %1572 = vrot.lane.b32.xlu0 %v799, 48
        %v1573 = vpop.permute.xlu0 %1572
        %1574 = vrot.lane.b32.xlu0 %v800, 48
        %v1575 = vpop.permute.xlu0 %1574
        %1576 = vrot.lane.b32.xlu0 %v801, 48
        %v1577 = vpop.permute.xlu0 %1576
        %1578 = vrot.lane.b32.xlu0 %v802, 48
        %v1579 = vpop.permute.xlu0 %1578
        %1580 = vrot.lane.b32.xlu0 %v803, 48
        %v1581 = vpop.permute.xlu0 %1580
        %1582 = vrot.lane.b32.xlu0 %v804, 48
        %v1583 = vpop.permute.xlu0 %1582
        %1584 = vrot.lane.b32.xlu0 %v805, 48
        %v1585 = vpop.permute.xlu0 %1584
        %1586 = vrot.lane.b32.xlu0 %v806, 48
        %v1587 = vpop.permute.xlu0 %1586
        %1588 = vrot.lane.b32.xlu0 %v807, 48
        %v1589 = vpop.permute.xlu0 %1588
        %1590 = vrot.lane.b32.xlu0 %v808, 48
        %v1591 = vpop.permute.xlu0 %1590
        %1592 = vrot.lane.b32.xlu0 %v809, 48
        %v1593 = vpop.permute.xlu0 %1592
        %1594 = vrot.lane.b32.xlu0 %v810, 48
        %v1595 = vpop.permute.xlu0 %1594
        %1596 = vrot.lane.b32.xlu0 %v811, 48
        %v1597 = vpop.permute.xlu0 %1596
        %1598 = vrot.lane.b32.xlu0 %v812, 48
        %v1599 = vpop.permute.xlu0 %1598
        %1600 = vrot.lane.b32.xlu0 %v813, 48
        %v1601 = vpop.permute.xlu0 %1600
        %1602 = vrot.lane.b32.xlu0 %v814, 48
        %v1603 = vpop.permute.xlu0 %1602
        %1604 = vrot.lane.b32.xlu0 %v815, 48
        %v1605 = vpop.permute.xlu0 %1604
        %1606 = vrot.lane.b32.xlu0 %v816, 48
        %v1607 = vpop.permute.xlu0 %1606
        %1608 = vrot.lane.b32.xlu0 %v817, 48
        %v1609 = vpop.permute.xlu0 %1608
        %1610 = vrot.lane.b32.xlu0 %v818, 48
        %v1611 = vpop.permute.xlu0 %1610
        %1612 = vrot.lane.b32.xlu0 %v819, 48
        %v1613 = vpop.permute.xlu0 %1612
        %1614 = vrot.lane.b32.xlu0 %v820, 48
        %v1615 = vpop.permute.xlu0 %1614
        %1616 = vrot.lane.b32.xlu0 %v821, 48
        %v1617 = vpop.permute.xlu0 %1616
        %1618 = vrot.lane.b32.xlu0 %v822, 48
        %v1619 = vpop.permute.xlu0 %1618
        %1620 = vrot.lane.b32.xlu0 %v823, 48
        %v1621 = vpop.permute.xlu0 %1620
        %1622 = vrot.lane.b32.xlu0 %v824, 48
        %v1623 = vpop.permute.xlu0 %1622
        %1624 = vrot.lane.b32.xlu0 %v825, 48
        %v1625 = vpop.permute.xlu0 %1624
        %1690 = vrot.lane.b32.xlu0 %v826, 56
        %v1691 = vpop.permute.xlu0 %1690
        %1692 = vrot.lane.b32.xlu0 %v827, 56
        %v1693 = vpop.permute.xlu0 %1692
        %1694 = vrot.lane.b32.xlu0 %v828, 56
        %v1695 = vpop.permute.xlu0 %1694
        %1696 = vrot.lane.b32.xlu0 %v829, 56
        %v1697 = vpop.permute.xlu0 %1696
        %1698 = vrot.lane.b32.xlu0 %v830, 56
        %v1699 = vpop.permute.xlu0 %1698
        %1700 = vrot.lane.b32.xlu0 %v831, 56
        %v1701 = vpop.permute.xlu0 %1700
        %1702 = vrot.lane.b32.xlu0 %v832, 56
        %v1703 = vpop.permute.xlu0 %1702
        %1704 = vrot.lane.b32.xlu0 %v833, 56
        %v1705 = vpop.permute.xlu0 %1704
        %1706 = vrot.lane.b32.xlu0 %v834, 56
        %v1707 = vpop.permute.xlu0 %1706
        %1708 = vrot.lane.b32.xlu0 %v835, 56
        %v1709 = vpop.permute.xlu0 %1708
        %1710 = vrot.lane.b32.xlu0 %v836, 56
        %v1711 = vpop.permute.xlu0 %1710
        %1712 = vrot.lane.b32.xlu0 %v837, 56
        %v1713 = vpop.permute.xlu0 %1712
        %1714 = vrot.lane.b32.xlu0 %v838, 56
        %v1715 = vpop.permute.xlu0 %1714
        %1716 = vrot.lane.b32.xlu0 %v839, 56
        %v1717 = vpop.permute.xlu0 %1716
        %1718 = vrot.lane.b32.xlu0 %v840, 56
        %v1719 = vpop.permute.xlu0 %1718
        %1720 = vrot.lane.b32.xlu0 %v841, 56
        %v1721 = vpop.permute.xlu0 %1720
        %1722 = vrot.lane.b32.xlu0 %v842, 56
        %v1723 = vpop.permute.xlu0 %1722
        %1724 = vrot.lane.b32.xlu0 %v843, 56
        %v1725 = vpop.permute.xlu0 %1724
        %1726 = vrot.lane.b32.xlu0 %v844, 56
        %v1727 = vpop.permute.xlu0 %1726
        %1728 = vrot.lane.b32.xlu0 %v845, 56
        %v1729 = vpop.permute.xlu0 %1728
        %1730 = vrot.lane.b32.xlu0 %v846, 56
        %v1731 = vpop.permute.xlu0 %1730
        %1732 = vrot.lane.b32.xlu0 %v847, 56
        %v1733 = vpop.permute.xlu0 %1732
        %1734 = vrot.lane.b32.xlu0 %v848, 56
        %v1735 = vpop.permute.xlu0 %1734
        %1736 = vrot.lane.b32.xlu0 %v849, 56
        %v1737 = vpop.permute.xlu0 %1736
        %1738 = vrot.lane.b32.xlu0 %v850, 56
        %v1739 = vpop.permute.xlu0 %1738
        %1740 = vrot.lane.b32.xlu0 %v851, 56
        %v1741 = vpop.permute.xlu0 %1740
        %1742 = vrot.lane.b32.xlu0 %v852, 56
        %v1743 = vpop.permute.xlu0 %1742
        %1744 = vrot.lane.b32.xlu0 %v853, 56
        %v1745 = vpop.permute.xlu0 %1744
        %1746 = vrot.lane.b32.xlu0 %v854, 56
        %v1747 = vpop.permute.xlu0 %1746
        %1748 = vrot.lane.b32.xlu0 %v855, 56
        %v1749 = vpop.permute.xlu0 %1748
        %1750 = vrot.lane.b32.xlu0 %v856, 56
        %v1751 = vpop.permute.xlu0 %1750
        %1752 = vrot.lane.b32.xlu0 %v857, 56
        %v1753 = vpop.permute.xlu0 %1752
        %1818 = vrot.lane.b32.xlu0 %v858, 64
        %v1819 = vpop.permute.xlu0 %1818
        %1820 = vrot.lane.b32.xlu0 %v859, 64
        %v1821 = vpop.permute.xlu0 %1820
        %1822 = vrot.lane.b32.xlu0 %v860, 64
        %v1823 = vpop.permute.xlu0 %1822
        %1824 = vrot.lane.b32.xlu0 %v861, 64
        %v1825 = vpop.permute.xlu0 %1824
        %1826 = vrot.lane.b32.xlu0 %v862, 64
        %v1827 = vpop.permute.xlu0 %1826
        %1828 = vrot.lane.b32.xlu0 %v863, 64
        %v1829 = vpop.permute.xlu0 %1828
        %1830 = vrot.lane.b32.xlu0 %v864, 64
        %v1831 = vpop.permute.xlu0 %1830
        %1832 = vrot.lane.b32.xlu0 %v865, 64
        %v1833 = vpop.permute.xlu0 %1832
        %1834 = vrot.lane.b32.xlu0 %v866, 64
        %v1835 = vpop.permute.xlu0 %1834
        %1836 = vrot.lane.b32.xlu0 %v867, 64
        %v1837 = vpop.permute.xlu0 %1836
        %1838 = vrot.lane.b32.xlu0 %v868, 64
        %v1839 = vpop.permute.xlu0 %1838
        %1840 = vrot.lane.b32.xlu0 %v869, 64
        %v1841 = vpop.permute.xlu0 %1840
        %1842 = vrot.lane.b32.xlu0 %v870, 64
        %v1843 = vpop.permute.xlu0 %1842
        %1844 = vrot.lane.b32.xlu0 %v871, 64
        %v1845 = vpop.permute.xlu0 %1844
        %1846 = vrot.lane.b32.xlu0 %v872, 64
        %v1847 = vpop.permute.xlu0 %1846
        %1848 = vrot.lane.b32.xlu0 %v873, 64
        %v1849 = vpop.permute.xlu0 %1848
        %1850 = vrot.lane.b32.xlu0 %v874, 64
        %v1851 = vpop.permute.xlu0 %1850
        %1852 = vrot.lane.b32.xlu0 %v875, 64
        %v1853 = vpop.permute.xlu0 %1852
        %1854 = vrot.lane.b32.xlu0 %v876, 64
        %v1855 = vpop.permute.xlu0 %1854
        %1856 = vrot.lane.b32.xlu0 %v877, 64
        %v1857 = vpop.permute.xlu0 %1856
        %1858 = vrot.lane.b32.xlu0 %v878, 64
        %v1859 = vpop.permute.xlu0 %1858
        %1860 = vrot.lane.b32.xlu0 %v879, 64
        %v1861 = vpop.permute.xlu0 %1860
        %1862 = vrot.lane.b32.xlu0 %v880, 64
        %v1863 = vpop.permute.xlu0 %1862
        %1864 = vrot.lane.b32.xlu0 %v881, 64
        %v1865 = vpop.permute.xlu0 %1864
        %1866 = vrot.lane.b32.xlu0 %v882, 64
        %v1867 = vpop.permute.xlu0 %1866
        %1868 = vrot.lane.b32.xlu0 %v883, 64
        %v1869 = vpop.permute.xlu0 %1868
        %1870 = vrot.lane.b32.xlu0 %v884, 64
        %v1871 = vpop.permute.xlu0 %1870
        %1872 = vrot.lane.b32.xlu0 %v885, 64
        %v1873 = vpop.permute.xlu0 %1872
        %1874 = vrot.lane.b32.xlu0 %v886, 64
        %v1875 = vpop.permute.xlu0 %1874
        %1876 = vrot.lane.b32.xlu0 %v887, 64
        %v1877 = vpop.permute.xlu0 %1876
        %1878 = vrot.lane.b32.xlu0 %v888, 64
        %v1879 = vpop.permute.xlu0 %1878
        %1880 = vrot.lane.b32.xlu0 %v889, 64
        %v1881 = vpop.permute.xlu0 %1880
        %v1914 = vsel %vm526, %v601, %v923
        %v1915 = vsel %vm526, %v602, %v925
        %v1916 = vsel %vm526, %v603, %v927
        %v1917 = vsel %vm526, %v604, %v929
        %v1918 = vsel %vm526, %v605, %v931
        %v1919 = vsel %vm526, %v606, %v933
        %v1920 = vsel %vm526, %v607, %v935
        %v1921 = vsel %vm526, %v608, %v937
        %v1922 = vsel %vm526, %v609, %v939
        %v1923 = vsel %vm526, %v610, %v941
        %v1924 = vsel %vm526, %v611, %v943
        %v1925 = vsel %vm526, %v612, %v945
        %v1926 = vsel %vm526, %v613, %v947
        %v1927 = vsel %vm526, %v614, %v949
        %v1928 = vsel %vm526, %v615, %v951
        %v1929 = vsel %vm526, %v616, %v953
        %v1930 = vsel %vm526, %v617, %v955
        %v1931 = vsel %vm526, %v618, %v957
        %v1932 = vsel %vm526, %v619, %v959
        %v1933 = vsel %vm526, %v620, %v961
        %v1934 = vsel %vm526, %v621, %v963
        %v1935 = vsel %vm526, %v622, %v965
        %v1936 = vsel %vm526, %v623, %v967
        %v1937 = vsel %vm526, %v624, %v969
        %v1938 = vsel %vm526, %v625, %v971
        %v1939 = vsel %vm526, %v626, %v973
        %v1940 = vsel %vm526, %v627, %v975
        %v1941 = vsel %vm526, %v628, %v977
        %v1942 = vsel %vm526, %v629, %v979
        %v1943 = vsel %vm526, %v630, %v981
        %v1944 = vsel %vm526, %v631, %v983
        %v1945 = vsel %vm526, %v632, %v985
        %vm1946 = vcmask 130048
        %v1947 = vsel %vm1946, %v1914, %v1051
        %v1948 = vsel %vm1946, %v1915, %v1053
        %v1949 = vsel %vm1946, %v1916, %v1055
        %v1950 = vsel %vm1946, %v1917, %v1057
        %v1951 = vsel %vm1946, %v1918, %v1059
        %v1952 = vsel %vm1946, %v1919, %v1061
        %v1953 = vsel %vm1946, %v1920, %v1063
        %v1954 = vsel %vm1946, %v1921, %v1065
        %v1955 = vsel %vm1946, %v1922, %v1067
        %v1956 = vsel %vm1946, %v1923, %v1069
        %v1957 = vsel %vm1946, %v1924, %v1071
        %v1958 = vsel %vm1946, %v1925, %v1073
        %v1959 = vsel %vm1946, %v1926, %v1075
        %v1960 = vsel %vm1946, %v1927, %v1077
        %v1961 = vsel %vm1946, %v1928, %v1079
        %v1962 = vsel %vm1946, %v1929, %v1081
        %v1963 = vsel %vm1946, %v1930, %v1083
        %v1964 = vsel %vm1946, %v1931, %v1085
        %v1965 = vsel %vm1946, %v1932, %v1087
        %v1966 = vsel %vm1946, %v1933, %v1089
        %v1967 = vsel %vm1946, %v1934, %v1091
        %v1968 = vsel %vm1946, %v1935, %v1093
        %v1969 = vsel %vm1946, %v1936, %v1095
        %v1970 = vsel %vm1946, %v1937, %v1097
        %v1971 = vsel %vm1946, %v1938, %v1099
        %v1972 = vsel %vm1946, %v1939, %v1101
        %v1973 = vsel %vm1946, %v1940, %v1103
        %v1974 = vsel %vm1946, %v1941, %v1105
        %v1975 = vsel %vm1946, %v1942, %v1107
        %v1976 = vsel %vm1946, %v1943, %v1109
        %v1977 = vsel %vm1946, %v1944, %v1111
        %v1978 = vsel %vm1946, %v1945, %v1113
        %vm1979 = vcmask 195584
        %v1980 = vsel %vm1979, %v1947, %v1179
        %v1981 = vsel %vm1979, %v1948, %v1181
        %v1982 = vsel %vm1979, %v1949, %v1183
        %v1983 = vsel %vm1979, %v1950, %v1185
        %v1984 = vsel %vm1979, %v1951, %v1187
        %v1985 = vsel %vm1979, %v1952, %v1189
        %v1986 = vsel %vm1979, %v1953, %v1191
        %v1987 = vsel %vm1979, %v1954, %v1193
        %v1988 = vsel %vm1979, %v1955, %v1195
        %v1989 = vsel %vm1979, %v1956, %v1197
        %v1990 = vsel %vm1979, %v1957, %v1199
        %v1991 = vsel %vm1979, %v1958, %v1201
        %v1992 = vsel %vm1979, %v1959, %v1203
        %v1993 = vsel %vm1979, %v1960, %v1205
        %v1994 = vsel %vm1979, %v1961, %v1207
        %v1995 = vsel %vm1979, %v1962, %v1209
        %v1996 = vsel %vm1979, %v1963, %v1211
        %v1997 = vsel %vm1979, %v1964, %v1213
        %v1998 = vsel %vm1979, %v1965, %v1215
        %v1999 = vsel %vm1979, %v1966, %v1217
        %v2000 = vsel %vm1979, %v1967, %v1219
        %v2001 = vsel %vm1979, %v1968, %v1221
        %v2002 = vsel %vm1979, %v1969, %v1223
        %v2003 = vsel %vm1979, %v1970, %v1225
        %v2004 = vsel %vm1979, %v1971, %v1227
        %v2005 = vsel %vm1979, %v1972, %v1229
        %v2006 = vsel %vm1979, %v1973, %v1231
        %v2007 = vsel %vm1979, %v1974, %v1233
        %v2008 = vsel %vm1979, %v1975, %v1235
        %v2009 = vsel %vm1979, %v1976, %v1237
        %v2010 = vsel %vm1979, %v1977, %v1239
        %v2011 = vsel %vm1979, %v1978, %v1241
        %vm2012 = vcmask 261120
        %v2013 = vsel %vm2012, %v1980, %v1307
        %v2014 = vsel %vm2012, %v1981, %v1309
        %v2015 = vsel %vm2012, %v1982, %v1311
        %v2016 = vsel %vm2012, %v1983, %v1313
        %v2017 = vsel %vm2012, %v1984, %v1315
        %v2018 = vsel %vm2012, %v1985, %v1317
        %v2019 = vsel %vm2012, %v1986, %v1319
        %v2020 = vsel %vm2012, %v1987, %v1321
        %v2021 = vsel %vm2012, %v1988, %v1323
        %v2022 = vsel %vm2012, %v1989, %v1325
        %v2023 = vsel %vm2012, %v1990, %v1327
        %v2024 = vsel %vm2012, %v1991, %v1329
        %v2025 = vsel %vm2012, %v1992, %v1331
        %v2026 = vsel %vm2012, %v1993, %v1333
        %v2027 = vsel %vm2012, %v1994, %v1335
        %v2028 = vsel %vm2012, %v1995, %v1337
        %v2029 = vsel %vm2012, %v1996, %v1339
        %v2030 = vsel %vm2012, %v1997, %v1341
        %v2031 = vsel %vm2012, %v1998, %v1343
        %v2032 = vsel %vm2012, %v1999, %v1345
        %v2033 = vsel %vm2012, %v2000, %v1347
        %v2034 = vsel %vm2012, %v2001, %v1349
        %v2035 = vsel %vm2012, %v2002, %v1351
        %v2036 = vsel %vm2012, %v2003, %v1353
        %v2037 = vsel %vm2012, %v2004, %v1355
        %v2038 = vsel %vm2012, %v2005, %v1357
        %v2039 = vsel %vm2012, %v2006, %v1359
        %v2040 = vsel %vm2012, %v2007, %v1361
        %v2041 = vsel %vm2012, %v2008, %v1363
        %v2042 = vsel %vm2012, %v2009, %v1365
        %v2043 = vsel %vm2012, %v2010, %v1367
        %v2044 = vsel %vm2012, %v2011, %v1369
        %vm2045 = vcmask 326656
        %v2046 = vsel %vm2045, %v2013, %v1435
        %v2047 = vsel %vm2045, %v2014, %v1437
        %v2048 = vsel %vm2045, %v2015, %v1439
        %v2049 = vsel %vm2045, %v2016, %v1441
        %v2050 = vsel %vm2045, %v2017, %v1443
        %v2051 = vsel %vm2045, %v2018, %v1445
        %v2052 = vsel %vm2045, %v2019, %v1447
        %v2053 = vsel %vm2045, %v2020, %v1449
        %v2054 = vsel %vm2045, %v2021, %v1451
        %v2055 = vsel %vm2045, %v2022, %v1453
        %v2056 = vsel %vm2045, %v2023, %v1455
        %v2057 = vsel %vm2045, %v2024, %v1457
        %v2058 = vsel %vm2045, %v2025, %v1459
        %v2059 = vsel %vm2045, %v2026, %v1461
        %v2060 = vsel %vm2045, %v2027, %v1463
        %v2061 = vsel %vm2045, %v2028, %v1465
        %v2062 = vsel %vm2045, %v2029, %v1467
        %v2063 = vsel %vm2045, %v2030, %v1469
        %v2064 = vsel %vm2045, %v2031, %v1471
        %v2065 = vsel %vm2045, %v2032, %v1473
        %v2066 = vsel %vm2045, %v2033, %v1475
        %v2067 = vsel %vm2045, %v2034, %v1477
        %v2068 = vsel %vm2045, %v2035, %v1479
        %v2069 = vsel %vm2045, %v2036, %v1481
        %v2070 = vsel %vm2045, %v2037, %v1483
        %v2071 = vsel %vm2045, %v2038, %v1485
        %v2072 = vsel %vm2045, %v2039, %v1487
        %v2073 = vsel %vm2045, %v2040, %v1489
        %v2074 = vsel %vm2045, %v2041, %v1491
        %v2075 = vsel %vm2045, %v2042, %v1493
        %v2076 = vsel %vm2045, %v2043, %v1495
        %v2077 = vsel %vm2045, %v2044, %v1497
        %vm2078 = vcmask 392192
        %v2079 = vsel %vm2078, %v2046, %v1563
        %v2080 = vsel %vm2078, %v2047, %v1565
        %v2081 = vsel %vm2078, %v2048, %v1567
        %v2082 = vsel %vm2078, %v2049, %v1569
        %v2083 = vsel %vm2078, %v2050, %v1571
        %v2084 = vsel %vm2078, %v2051, %v1573
        %v2085 = vsel %vm2078, %v2052, %v1575
        %v2086 = vsel %vm2078, %v2053, %v1577
        %v2087 = vsel %vm2078, %v2054, %v1579
        %v2088 = vsel %vm2078, %v2055, %v1581
        %v2089 = vsel %vm2078, %v2056, %v1583
        %v2090 = vsel %vm2078, %v2057, %v1585
        %v2091 = vsel %vm2078, %v2058, %v1587
        %v2092 = vsel %vm2078, %v2059, %v1589
        %v2093 = vsel %vm2078, %v2060, %v1591
        %v2094 = vsel %vm2078, %v2061, %v1593
        %v2095 = vsel %vm2078, %v2062, %v1595
        %v2096 = vsel %vm2078, %v2063, %v1597
        %v2097 = vsel %vm2078, %v2064, %v1599
        %v2098 = vsel %vm2078, %v2065, %v1601
        %v2099 = vsel %vm2078, %v2066, %v1603
        %v2100 = vsel %vm2078, %v2067, %v1605
        %v2101 = vsel %vm2078, %v2068, %v1607
        %v2102 = vsel %vm2078, %v2069, %v1609
        %v2103 = vsel %vm2078, %v2070, %v1611
        %v2104 = vsel %vm2078, %v2071, %v1613
        %v2105 = vsel %vm2078, %v2072, %v1615
        %v2106 = vsel %vm2078, %v2073, %v1617
        %v2107 = vsel %vm2078, %v2074, %v1619
        %v2108 = vsel %vm2078, %v2075, %v1621
        %v2109 = vsel %vm2078, %v2076, %v1623
        %v2110 = vsel %vm2078, %v2077, %v1625
        %vm2111 = vcmask 457728
        %v2112 = vsel %vm2111, %v2079, %v1691
        %v2113 = vsel %vm2111, %v2080, %v1693
        %v2114 = vsel %vm2111, %v2081, %v1695
        %v2115 = vsel %vm2111, %v2082, %v1697
        %v2116 = vsel %vm2111, %v2083, %v1699
        %v2117 = vsel %vm2111, %v2084, %v1701
        %v2118 = vsel %vm2111, %v2085, %v1703
        %v2119 = vsel %vm2111, %v2086, %v1705
        %v2120 = vsel %vm2111, %v2087, %v1707
        %v2121 = vsel %vm2111, %v2088, %v1709
        %v2122 = vsel %vm2111, %v2089, %v1711
        %v2123 = vsel %vm2111, %v2090, %v1713
        %v2124 = vsel %vm2111, %v2091, %v1715
        %v2125 = vsel %vm2111, %v2092, %v1717
        %v2126 = vsel %vm2111, %v2093, %v1719
        %v2127 = vsel %vm2111, %v2094, %v1721
        %v2128 = vsel %vm2111, %v2095, %v1723
        %v2129 = vsel %vm2111, %v2096, %v1725
        %v2130 = vsel %vm2111, %v2097, %v1727
        %v2131 = vsel %vm2111, %v2098, %v1729
        %v2132 = vsel %vm2111, %v2099, %v1731
        %v2133 = vsel %vm2111, %v2100, %v1733
        %v2134 = vsel %vm2111, %v2101, %v1735
        %v2135 = vsel %vm2111, %v2102, %v1737
        %v2136 = vsel %vm2111, %v2103, %v1739
        %v2137 = vsel %vm2111, %v2104, %v1741
        %v2138 = vsel %vm2111, %v2105, %v1743
        %v2139 = vsel %vm2111, %v2106, %v1745
        %v2140 = vsel %vm2111, %v2107, %v1747
        %v2141 = vsel %vm2111, %v2108, %v1749
        %v2142 = vsel %vm2111, %v2109, %v1751
        %v2143 = vsel %vm2111, %v2110, %v1753
        %vm2144 = vcmask 523264
        %v2145 = vsel %vm2144, %v2112, %v1819
        %v2146 = vsel %vm2144, %v2113, %v1821
        %v2147 = vsel %vm2144, %v2114, %v1823
        %v2148 = vsel %vm2144, %v2115, %v1825
        %v2149 = vsel %vm2144, %v2116, %v1827
        %v2150 = vsel %vm2144, %v2117, %v1829
        %v2151 = vsel %vm2144, %v2118, %v1831
        %v2152 = vsel %vm2144, %v2119, %v1833
        %v2153 = vsel %vm2144, %v2120, %v1835
        %v2154 = vsel %vm2144, %v2121, %v1837
        %v2155 = vsel %vm2144, %v2122, %v1839
        %v2156 = vsel %vm2144, %v2123, %v1841
        %v2157 = vsel %vm2144, %v2124, %v1843
        %v2158 = vsel %vm2144, %v2125, %v1845
        %v2159 = vsel %vm2144, %v2126, %v1847
        %v2160 = vsel %vm2144, %v2127, %v1849
        %v2161 = vsel %vm2144, %v2128, %v1851
        %v2162 = vsel %vm2144, %v2129, %v1853
        %v2163 = vsel %vm2144, %v2130, %v1855
        %v2164 = vsel %vm2144, %v2131, %v1857
        %v2165 = vsel %vm2144, %v2132, %v1859
        %v2166 = vsel %vm2144, %v2133, %v1861
        %v2167 = vsel %vm2144, %v2134, %v1863
        %v2168 = vsel %vm2144, %v2135, %v1865
        %v2169 = vsel %vm2144, %v2136, %v1867
        %v2170 = vsel %vm2144, %v2137, %v1869
        %v2171 = vsel %vm2144, %v2138, %v1871
        %v2172 = vsel %vm2144, %v2139, %v1873
        %v2173 = vsel %vm2144, %v2140, %v1875
        %v2174 = vsel %vm2144, %v2141, %v1877
        %v2175 = vsel %vm2144, %v2142, %v1879
        %v2176 = vsel %vm2144, %v2143, %v1881
        %v2177 = vpack.c.bf16 %v2146, %v2145
        %v2178 = vpack.c.bf16 %v2148, %v2147
        %v2179 = vpack.c.bf16 %v2150, %v2149
        %v2180 = vpack.c.bf16 %v2152, %v2151
        %v2181 = vpack.c.bf16 %v2154, %v2153
        %v2182 = vpack.c.bf16 %v2156, %v2155
        %v2183 = vpack.c.bf16 %v2158, %v2157
        %v2184 = vpack.c.bf16 %v2160, %v2159
        %v2185 = vpack.c.bf16 %v2162, %v2161
        %v2186 = vpack.c.bf16 %v2164, %v2163
        %v2187 = vpack.c.bf16 %v2166, %v2165
        %v2188 = vpack.c.bf16 %v2168, %v2167
        %v2189 = vpack.c.bf16 %v2170, %v2169
        %v2190 = vpack.c.bf16 %v2172, %v2171
        %v2191 = vpack.c.bf16 %v2174, %v2173
        %v2192 = vpack.c.bf16 %v2176, %v2175
        %v2193 = vld [vmem:[%s3] sm:$0xf]
        %v2194 = vld [vmem:[%s3 + $0x4] sm:$0xf]
        %v2195 = vld [vmem:[%s3 + $0x8] sm:$0xf]
        %v2196 = vld [vmem:[%s3 + $0xc] sm:$0xf]
        %v2197 = vld [vmem:[%s3 + $0x10] sm:$0xf]
        %v2198 = vld [vmem:[%s3 + $0x14] sm:$0xf]
        %v2199 = vld [vmem:[%s3 + $0x18] sm:$0xf]
        %v2200 = vld [vmem:[%s3 + $0x1c] sm:$0xf]
        %v2201 = vld [vmem:[%s3 + $0x20] sm:$0xf]
        %v2202 = vld [vmem:[%s4] sm:$0x1]
        %v2204 = vlaneseq
        %v2205 = vshrl.u32 %v2204, 7
        %v2206 = vsub.s32 0, %v2205
        %v2207 = vrot.slane %v2202, %v2206
        %v2218 = vunpack.c.l.b16 %v2193
        %v2219 = vunpack.c.l.b16 %v2194
        %v2220 = vunpack.c.l.b16 %v2195
        %v2221 = vunpack.c.l.b16 %v2196
        %v2222 = vunpack.c.l.b16 %v2197
        %v2223 = vunpack.c.l.b16 %v2198
        %v2224 = vunpack.c.l.b16 %v2199
        %v2225 = vunpack.c.l.b16 %v2200
        %v2226 = vunpack.c.l.b16 %v2201
        %v2227 = vpack.c.b16 %v2219, %v2218
        %v2228 = vpack.c.b16 %v2221, %v2220
        %v2229 = vpack.c.b16 %v2223, %v2222
        %v2230 = vpack.c.b16 %v2225, %v2224
        %v2231 = vpack.c.b16 %v2226, %v2226
        %vm2236 = vcmask 588800
        %v2238 = vsel %vm2236, %v2177, 0
        %v2241 = vsel %vm2236, %v2178, 0
        %v2244 = vsel %vm2236, %v2179, 0
        %v2247 = vsel %vm2236, %v2180, 0
        %v2250 = vsel %vm2236, %v2181, 0
        %v2253 = vsel %vm2236, %v2182, 0
        %v2256 = vsel %vm2236, %v2183, 0
        %v2259 = vsel %vm2236, %v2184, 0
        %v2262 = vsel %vm2236, %v2185, 0
        %v2265 = vsel %vm2236, %v2186, 0
        %v2268 = vsel %vm2236, %v2187, 0
        %v2271 = vsel %vm2236, %v2188, 0
        %v2274 = vsel %vm2236, %v2189, 0
        %v2277 = vsel %vm2236, %v2190, 0
        %v2280 = vsel %vm2236, %v2191, 0
        %v2283 = vsel %vm2236, %v2192, 0
        %vm2285 = vcmask 1043456
        %v2287 = vsel %vm2285, %v2231, 0
        %2289 = vmatprep.subr.bf16.mxu0 0
        %2290 = vmatpush1.bf16.msra.mxu0 0
        %2291 = vmatprep.subr.bf16.mxu0 0
        %2292 = vmatpush1.bf16.msra.mxu0 0
        %2293 = vmatprep.subr.bf16.mxu0 0
        %2294 = vmatpush1.bf16.msra.mxu0 0
        %2295 = vmatprep.subr.bf16.mxu0 0
        %2296 = vmatpush1.bf16.msra.mxu0 %v2287
        %2297 = vmatprep.subr.bf16.mxu0 0
        %2298 = vmatpush1.bf16.msra.mxu0 %v2230
        %2299 = vmatprep.subr.bf16.mxu0 0
        %2300 = vmatpush1.bf16.msra.mxu0 %v2229
        %2301 = vmatprep.subr.bf16.mxu0 0
        %2302 = vmatpush1.bf16.msra.mxu0 %v2228
        %2303 = vmatprep.subr.bf16.mxu0 0
        %2304 = vmatpush1.bf16.msra.mxu0 %v2227
        %2305 = vmatprep.subr.bf16.mxu0 0
        %2306 = vmatpush2.bf16.msra.mxu0 0
        %2307 = vmatprep.subr.bf16.mxu0 0
        %2308 = vmatpush2.bf16.msra.mxu0 0
        %2309 = vmatprep.subr.bf16.mxu0 0
        %2310 = vmatpush2.bf16.msra.mxu0 0
        %2311 = vmatprep.subr.bf16.mxu0 0
        %2312 = vmatpush2.bf16.msra.mxu0 0
        %2313 = vmatprep.subr.bf16.mxu0 0
        %2314 = vmatpush2.bf16.msra.mxu0 0
        %2315 = vmatprep.subr.bf16.mxu0 0
        %2316 = vmatpush2.bf16.msra.mxu0 0
        %2317 = vmatprep.subr.bf16.mxu0 0
        %2318 = vmatpush2.bf16.msra.mxu0 0
        %2319 = vmatprep.subr.bf16.mxu0 0
        %2320 = vmatpush2.bf16.msra.mxu0 0
        %2321 = vmatprep.mubr.bf16.mxu0 0
        %2322 = vmatmul.mubr.bf16.gmra.mxu0 %v2238
        %v2323 = vpop.f32.mrf.mxu0
        %v2324 = vadd.f32 %v2207, %v2323
        %v2325 = vpop.f32.mrf.mxu0
        %v2326 = vpop.f32.mrf.mxu0
        %v2327 = vadd.f32 %v2207, %v2326
        %v2328 = vpop.f32.mrf.mxu0
        %2329 = vmatprep.mubr.bf16.mxu0 0
        %2330 = vmatmul.mubr.bf16.gmra.mxu0 %v2241
        %v2331 = vpop.f32.mrf.mxu0
        %v2332 = vadd.f32 %v2207, %v2331
        %v2333 = vpop.f32.mrf.mxu0
        %v2334 = vpop.f32.mrf.mxu0
        %v2335 = vadd.f32 %v2207, %v2334
        %v2336 = vpop.f32.mrf.mxu0
        %2337 = vmatprep.mubr.bf16.mxu0 0
        %2338 = vmatmul.mubr.bf16.gmra.mxu0 %v2244
        %v2339 = vpop.f32.mrf.mxu0
        %v2340 = vadd.f32 %v2207, %v2339
        %v2341 = vpop.f32.mrf.mxu0
        %v2342 = vpop.f32.mrf.mxu0
        %v2343 = vadd.f32 %v2207, %v2342
        %v2344 = vpop.f32.mrf.mxu0
        %2345 = vmatprep.mubr.bf16.mxu0 0
        %2346 = vmatmul.mubr.bf16.gmra.mxu0 %v2247
        %v2347 = vpop.f32.mrf.mxu0
        %v2348 = vadd.f32 %v2207, %v2347
        %v2349 = vpop.f32.mrf.mxu0
        %v2350 = vpop.f32.mrf.mxu0
        %v2351 = vadd.f32 %v2207, %v2350
        %v2352 = vpop.f32.mrf.mxu0
        %2353 = vmatprep.mubr.bf16.mxu0 0
        %2354 = vmatmul.mubr.bf16.gmra.mxu0 %v2250
        %v2355 = vpop.f32.mrf.mxu0
        %v2356 = vadd.f32 %v2207, %v2355
        %v2357 = vpop.f32.mrf.mxu0
        %v2358 = vpop.f32.mrf.mxu0
        %v2359 = vadd.f32 %v2207, %v2358
        %v2360 = vpop.f32.mrf.mxu0
        %2361 = vmatprep.mubr.bf16.mxu0 0
        %2362 = vmatmul.mubr.bf16.gmra.mxu0 %v2253
        %v2363 = vpop.f32.mrf.mxu0
        %v2364 = vadd.f32 %v2207, %v2363
        %v2365 = vpop.f32.mrf.mxu0
        %v2366 = vpop.f32.mrf.mxu0
        %v2367 = vadd.f32 %v2207, %v2366
        %v2368 = vpop.f32.mrf.mxu0
        %2369 = vmatprep.mubr.bf16.mxu0 0
        %2370 = vmatmul.mubr.bf16.gmra.mxu0 %v2256
        %v2371 = vpop.f32.mrf.mxu0
        %v2372 = vadd.f32 %v2207, %v2371
        %v2373 = vpop.f32.mrf.mxu0
        %v2374 = vpop.f32.mrf.mxu0
        %v2375 = vadd.f32 %v2207, %v2374
        %v2376 = vpop.f32.mrf.mxu0
        %2377 = vmatprep.mubr.bf16.mxu0 0
        %2378 = vmatmul.mubr.bf16.gmra.mxu0 %v2259
        %v2379 = vpop.f32.mrf.mxu0
        %v2380 = vadd.f32 %v2207, %v2379
        %v2381 = vpop.f32.mrf.mxu0
        %v2382 = vpop.f32.mrf.mxu0
        %v2383 = vadd.f32 %v2207, %v2382
        %v2384 = vpop.f32.mrf.mxu0
        %2385 = vmatprep.mubr.bf16.mxu0 0
        %2386 = vmatmul.mubr.bf16.gmra.mxu0 %v2262
        %v2387 = vpop.f32.mrf.mxu0
        %v2388 = vadd.f32 %v2207, %v2387
        %v2389 = vpop.f32.mrf.mxu0
        %v2390 = vpop.f32.mrf.mxu0
        %v2391 = vadd.f32 %v2207, %v2390
        %v2392 = vpop.f32.mrf.mxu0
        %2393 = vmatprep.mubr.bf16.mxu0 0
        %2394 = vmatmul.mubr.bf16.gmra.mxu0 %v2265
        %v2395 = vpop.f32.mrf.mxu0
        %v2396 = vadd.f32 %v2207, %v2395
        %v2397 = vpop.f32.mrf.mxu0
        %v2398 = vpop.f32.mrf.mxu0
        %v2399 = vadd.f32 %v2207, %v2398
        %v2400 = vpop.f32.mrf.mxu0
        %2401 = vmatprep.mubr.bf16.mxu0 0
        %2402 = vmatmul.mubr.bf16.gmra.mxu0 %v2268
        %v2403 = vpop.f32.mrf.mxu0
        %v2404 = vadd.f32 %v2207, %v2403
        %v2405 = vpop.f32.mrf.mxu0
        %v2406 = vpop.f32.mrf.mxu0
        %v2407 = vadd.f32 %v2207, %v2406
        %v2408 = vpop.f32.mrf.mxu0
        %2409 = vmatprep.mubr.bf16.mxu0 0
        %2410 = vmatmul.mubr.bf16.gmra.mxu0 %v2271
        %v2411 = vpop.f32.mrf.mxu0
        %v2412 = vadd.f32 %v2207, %v2411
        %v2413 = vpop.f32.mrf.mxu0
        %v2414 = vpop.f32.mrf.mxu0
        %v2415 = vadd.f32 %v2207, %v2414
        %v2416 = vpop.f32.mrf.mxu0
        %2417 = vmatprep.mubr.bf16.mxu0 0
        %2418 = vmatmul.mubr.bf16.gmra.mxu0 %v2274
        %v2419 = vpop.f32.mrf.mxu0
        %v2420 = vadd.f32 %v2207, %v2419
        %v2421 = vpop.f32.mrf.mxu0
        %v2422 = vpop.f32.mrf.mxu0
        %v2423 = vadd.f32 %v2207, %v2422
        %v2424 = vpop.f32.mrf.mxu0
        %2425 = vmatprep.mubr.bf16.mxu0 0
        %2426 = vmatmul.mubr.bf16.gmra.mxu0 %v2277
        %v2427 = vpop.f32.mrf.mxu0
        %v2428 = vadd.f32 %v2207, %v2427
        %v2429 = vpop.f32.mrf.mxu0
        %v2430 = vpop.f32.mrf.mxu0
        %v2431 = vadd.f32 %v2207, %v2430
        %v2432 = vpop.f32.mrf.mxu0
        %2433 = vmatprep.mubr.bf16.mxu0 0
        %2434 = vmatmul.mubr.bf16.gmra.mxu0 %v2280
        %v2435 = vpop.f32.mrf.mxu0
        %v2436 = vadd.f32 %v2207, %v2435
        %v2437 = vpop.f32.mrf.mxu0
        %v2438 = vpop.f32.mrf.mxu0
        %v2439 = vadd.f32 %v2207, %v2438
        %v2440 = vpop.f32.mrf.mxu0
        %2441 = vmatprep.mubr.bf16.mxu0 0
        %2442 = vmatmul.mubr.bf16.gmra.mxu0 %v2283
        %v2443 = vpop.f32.mrf.mxu0
        %v2444 = vadd.f32 %v2207, %v2443
        %v2445 = vpop.f32.mrf.mxu0
        %v2446 = vpop.f32.mrf.mxu0
        %v2447 = vadd.f32 %v2207, %v2446
        %v2448 = vpop.f32.mrf.mxu0
        %2449 = vdwg.mxu0
        %2450 = vst.msk [vmem:[%s217] sm:$0xff] %vm1946, %v2324
        %2451 = vst.msk [vmem:[%s217 + $0x8] sm:$0xff] %vm1946, %v2327
        %2452 = vst.msk [vmem:[%s217 + $0x10] sm:$0xff] %vm1946, %v2332
        %2453 = vst.msk [vmem:[%s217 + $0x18] sm:$0xff] %vm1946, %v2335
        %2454 = vst.msk [vmem:[%s217 + $0x20] sm:$0xff] %vm1946, %v2340
        %2455 = vst.msk [vmem:[%s217 + $0x28] sm:$0xff] %vm1946, %v2343
        %2456 = vst.msk [vmem:[%s217 + $0x30] sm:$0xff] %vm1946, %v2348
        %2457 = vst.msk [vmem:[%s217 + $0x38] sm:$0xff] %vm1946, %v2351
        %2458 = vst.msk [vmem:[%s217 + $0x40] sm:$0xff] %vm1946, %v2356
        %2459 = vst.msk [vmem:[%s217 + $0x48] sm:$0xff] %vm1946, %v2359
        %2460 = vst.msk [vmem:[%s217 + $0x50] sm:$0xff] %vm1946, %v2364
        %2461 = vst.msk [vmem:[%s217 + $0x58] sm:$0xff] %vm1946, %v2367
        %2462 = vst.msk [vmem:[%s217 + $0x60] sm:$0xff] %vm1946, %v2372
        %2463 = vst.msk [vmem:[%s217 + $0x68] sm:$0xff] %vm1946, %v2375
        %2464 = vst.msk [vmem:[%s217 + $0x70] sm:$0xff] %vm1946, %v2380
        %2465 = vst.msk [vmem:[%s217 + $0x78] sm:$0xff] %vm1946, %v2383
        %2466 = vst.msk [vmem:[%s217 + $0x80] sm:$0xff] %vm1946, %v2388
        %2467 = vst.msk [vmem:[%s217 + $0x88] sm:$0xff] %vm1946, %v2391
        %2468 = vst.msk [vmem:[%s217 + $0x90] sm:$0xff] %vm1946, %v2396
        %2469 = vst.msk [vmem:[%s217 + $0x98] sm:$0xff] %vm1946, %v2399
        %2470 = vst.msk [vmem:[%s217 + $0xa0] sm:$0xff] %vm1946, %v2404
        %2471 = vst.msk [vmem:[%s217 + $0xa8] sm:$0xff] %vm1946, %v2407
        %2472 = vst.msk [vmem:[%s217 + $0xb0] sm:$0xff] %vm1946, %v2412
        %2473 = vst.msk [vmem:[%s217 + $0xb8] sm:$0xff] %vm1946, %v2415
        %2474 = vst.msk [vmem:[%s217 + $0xc0] sm:$0xff] %vm1946, %v2420
        %2475 = vst.msk [vmem:[%s217 + $0xc8] sm:$0xff] %vm1946, %v2423
        %2476 = vst.msk [vmem:[%s217 + $0xd0] sm:$0xff] %vm1946, %v2428
        %2477 = vst.msk [vmem:[%s217 + $0xd8] sm:$0xff] %vm1946, %v2431
        %2478 = vst.msk [vmem:[%s217 + $0xe0] sm:$0xff] %vm1946, %v2436
        %2479 = vst.msk [vmem:[%s217 + $0xe8] sm:$0xff] %vm1946, %v2439
        %2480 = vst.msk [vmem:[%s217 + $0xf0] sm:$0xff] %vm1946, %v2444
        %2481 = vst.msk [vmem:[%s217 + $0xf8] sm:$0xff] %vm1946, %v2447
        %s2482 = sand.u32 %s137, 1
        %s2483 = scalar_lea.sflag [#allocation4], %s2482
        %s2484 = sand.u32 %s137, 1
        %s2485 = smul.addr %s2484, 256
        %s2486 = scalar_lea.vmem [#allocation3], %s2485
        // Predicated region
        $region41: #{tpu_custom_call.1} parent=39 // pred_check
          %p2487 = pneg %p147
        $region42: #{tpu_custom_call.1} parent=39 // pred_check_branch
          %2489 = sbr.rel (%p2487) target = $region44
        $region43: #{tpu_custom_call.1} parent=39 // pred_region
          %s2491 = ssub.s32 4096, 4096
          %2492 = vsyncadd %s2483, %s2491
          %s2493 = smul.addr %s19, 32
          %s2494 = smul.addr %s2493, 128
          %s2495 = scalar_lea.hbm %s5, %s2494
          %s2496 = sshll.u32 %s2486, 4
          %s2497 = int_to_ptr.vmem [resolvable:$true] %s2496
          %2502 = dma.vmem_to_hbm [thread:$0]  %s2497, 4096, %s2495, %s2483, 128, 128, 8
        $region44: #{tpu_custom_call.1} parent=39 // pred_fallthru
          _
      $region40: #{tpu_custom_call.1} parent=5 // pred_fallthru
        _
      %p2503 = scmp.le.s32.totalorder 2, %s14
      // Predicated region
      $region45: #{tpu_custom_call.1} parent=5 // pred_check
        %p2504 = pneg %p2503
      $region46: #{tpu_custom_call.1} parent=5 // pred_check_branch
        %2506 = sbr.rel (%p2504) target = $region48
      $region47: #{tpu_custom_call.1} parent=5 // pred_region
        %s2507 = ssub.s32 %s14, 2
        // Predicated region
        $region49: #{tpu_custom_call.1} parent=47 // pred_check
          %p2508 = pneg %p153
        $region50: #{tpu_custom_call.1} parent=47 // pred_check_branch
          %2510 = sbr.rel (%p2508) target = $region52
        $region51: #{tpu_custom_call.1} parent=47 // pred_region
          %s2511 = sand.u32 %s138, 1
          %s2512 = scalar_lea.sflag [#allocation4], %s2511
          %s2513 = sand.u32 %s138, 1
          %s2514 = smul.addr %s2513, 256
          %s2515 = scalar_lea.vmem [#allocation3], %s2514
          %2516 = dma.done %s2512, 4096
        $region52: #{tpu_custom_call.1} parent=47 // pred_fallthru
          _
      $region48: #{tpu_custom_call.1} parent=5 // pred_fallthru
        _
    $region6: #{tpu_custom_call.1} parent=1 // loop_footer
      %s18 = sadd.s32 1, %s14
    $region7: #{tpu_custom_call.1} parent=1 // loop_footer_branch
      %13 = sbr.rel target = $region3
    $region8: #{tpu_custom_call.1} parent=1 // loop_exit
      _
    %2517 = vsyncpa [#allocation4], 1
    %s2518 = scalar_lea.sflag [#allocation4], 1
    %2519 = vsyncpa %s2518, 1

</llo_original>
